<compile_context>
chip_gen: v5e
topology: v5e:2x2
jax: 0.10.0
libtpu: 0.0.40
codegen_flags: <defaults>
</compile_context>

<pallas_src>
import functools

import jax
import jax.numpy as jnp
from jax.experimental import pallas as pl
from jax.experimental.pallas import tpu as pltpu

HIGHEST = jax.lax.Precision.HIGHEST


# --------------------------------------------------------------------------- fused kernel

def make_fused_kernel(rl_finetune, sample_mode):
    """Builds the per-config fused turn-loop kernel (config flags are static)."""

    def kernel(qproj_ref, gi_ref, h0_ref,
               w1h_ref, w2_ref, b2_ref, w3_ref, b3_ref,
               wh_ref, bh_ref,
               out_ref, logit_ref, idx_ref,
               h_scr):
        t = pl.program_id(1)                       # turn index (sequential "arbitrary" axis)
        TB, K, D = h0_ref.shape                    # per-block batch, instances, feature dim

        # ---- init VMEM-resident recurrent state at the first turn of each batch block ----
        @pl.when(t == 0)
        def _init():
            for k in range(K):                     # K is tiny and static
                h_scr[k] = h0_ref[:, k, :]

        # ---- per-turn precomputed query-side activations (VMEM resident, no per-turn DMA) ----
        q_lin = qproj_ref[:, pl.ds(t, 1), :][:, 0, :]      # (TB, D)  = q @ W1q + b1
        gi = gi_ref[:, pl.ds(t, 1), :][:, 0, :]            # (TB, 3D) = q @ [Wir|Wiz|Win] + bi

        # ---- policy MLP, batched over the K instances (2 matmuls with M = K*TB) ----
        h_rows = [h_scr[k] for k in range(K)]              # K x (TB, D)
        h_flat = jnp.concatenate(h_rows, axis=0)           # (K*TB, D), rows ordered k*TB + b
        q_rep = jnp.concatenate([q_lin] * K, axis=0)       # (K*TB, D)

        h1 = jnp.maximum(
            jnp.dot(h_flat, w1h_ref[...], preferred_element_type=jnp.float32) + q_rep, 0.0)
        h2 = jnp.maximum(
            jnp.dot(h1, w2_ref[...], preferred_element_type=jnp.float32) + b2_ref[...], 0.0)
        # Final (D -> 1) projection as VPU multiply + lane reduction (no N=1 MXU pass).
        # The reference PolicyNet's Sequential ends with ReLU, hence the outer maximum.
        s = jnp.maximum(
            jnp.sum(h2 * w3_ref[...], axis=-1, keepdims=True) + b3_ref[...], 0.0)  # (K*TB, 1)
        mlp_logits = jnp.concatenate(
            [s[k * TB:(k + 1) * TB] for k in range(K)], axis=-1)                   # (TB, K)

        # ---- instance selection ----
        k_iota = jax.lax.broadcasted_iota(jnp.int32, (TB, K), 1)
        if rl_finetune > 0 and sample_mode < 2:
            # top-1 of log_softmax(logits) + 1.0 == first argmax of the raw logits.
            # TODO(synk): sample_mode == 1 (Categorical sampling) not implemented; top-1 used.
            m = jnp.max(mlp_logits, axis=-1, keepdims=True)
            top1 = jnp.min(jnp.where(mlp_logits >= m, k_iota, K),
                           axis=-1, keepdims=True)                    # (TB, 1) first max idx
            warm = t < K                                              # i < instance_dim
            warm_ind = jnp.zeros((TB, 1), jnp.int32) + t              # t < K -> t % K == t
            inds = jnp.where(warm, warm_ind, top1)                    # (TB, 1) int32
            logits = jnp.where(warm, jnp.ones_like(mlp_logits), mlp_logits)
        else:
            if sample_mode == 3:                                      # fixed indices
                inds = jnp.zeros((TB, 1), jnp.int32)
            else:                                                     # circular (sample_mode 2)
                # TODO(synk): sample_mode 4 (random) / 5 (rollout) fall back to circular.
                inds = jnp.zeros((TB, 1), jnp.int32) + (t % K)
            logits = mlp_logits

        onehot = (k_iota == inds).astype(jnp.float32)                 # (TB, K)

        # ---- gather selected hidden row (K-wide one-hot select) ----
        h_sel = jnp.zeros((TB, D), jnp.float32)
        for k in range(K):
            h_sel = h_sel + onehot[:, k:k + 1] * h_rows[k]            # (TB, D)

        # ---- GRU cell: only the h-dependent fused (D, 3D) matmul is on the serial path ----
        gh = jnp.dot(h_sel, wh_ref[...], preferred_element_type=jnp.float32) + bh_ref[...]
        r = jax.nn.sigmoid(gi[:, :D] + gh[:, :D])
        z = jax.nn.sigmoid(gi[:, D:2 * D] + gh[:, D:2 * D])
        n = jnp.tanh(gi[:, 2 * D:] + r * gh[:, 2 * D:])
        h_new = (1.0 - z) * n + z * h_sel                             # (TB, D)

        # ---- fused scatter + per-turn output write (no separate full-state copy) ----
        for k in range(K):
            oh_k = onehot[:, k:k + 1]                                 # (TB, 1)
            blended = h_rows[k] * (1.0 - oh_k) + h_new * oh_k
            h_scr[k] = blended
            out_ref[:, k, :] = blended                                # out_ref view: (TB, K, D)

        # ---- tiny per-turn metadata into grid-resident blocks (one HBM writeback at end) ----
        logit_ref[:, pl.ds(t, 1), :] = logits[:, None, :]             # (TB, 1, K)
        idx_ref[:, pl.ds(t, 1), :] = inds[:, :, None]                 # (TB, 1, 1)

    return kernel


# --------------------------------------------------------------- ContextEncoder forward

@functools.partial(jax.jit, static_argnums=(3, 4, 5))
def context_encoder_forward(txt_feats, hiddens, params,
                            instance_dim, rl_finetune, sample_mode):
    """
    txt_feats: (B, T, D)   hiddens: (B, K, D) with K == instance_dim (> 1)
    Returns (output_feats (B,T,K,D), next_hiddens (B,K,D),
             sample_logits (B,T,K), sample_indices (B,T))
    Mirrors the instance_dim > 1 branch of ContextEncoder.forward.
    """
    B, T, D = txt_feats.shape
    _, K, _ = hiddens.shape
    assert K == instance_dim

    p = params
    txt = txt_feats.astype(jnp.float32)
    txt2 = txt.reshape(B * T, D)

    # Query-only matmuls hoisted off the serial turn loop (full B*T MXU fill, done by XLA).
    qproj_all = (jnp.dot(txt2, p["w1q"], precision=HIGHEST) + p["b1"]).reshape(B, T, D)
    gi_all = (jnp.dot(txt2, p["wi"], precision=HIGHEST) + p["bi"]).reshape(B, T, 3 * D)

    # Batch-tile the grid so v7x's two TensorCores can split the batch ("parallel" axis).
    # TB must equal B or be a multiple of 8 (sublane constraint on the (B,T,1)/(B,T,K) blocks).
    TB = B // 2 if (B % 16 == 0) else B
    NB = B // TB

    kernel = make_fused_kernel(rl_finetune, sample_mode)

    in_specs = [
        pl.BlockSpec((TB, T, D), lambda b, t: (b, 0, 0)),        # qproj (resident per b-block)
        pl.BlockSpec((TB, T, 3 * D), lambda b, t: (b, 0, 0)),    # gi    (resident per b-block)
        pl.BlockSpec((TB, K, D), lambda b, t: (b, 0, 0)),        # h0    (resident per b-block)
        pl.BlockSpec((D, D), lambda b, t: (0, 0)),               # w1h   (weights fully resident)
        pl.BlockSpec((D, D), lambda b, t: (0, 0)),               # w2
        pl.BlockSpec((1, D), lambda b, t: (0, 0)),               # b2
        pl.BlockSpec((1, D), lambda b, t: (0, 0)),               # w3 (row)
        pl.BlockSpec((1, 1), lambda b, t: (0, 0)),               # b3
        pl.BlockSpec((D, 3 * D), lambda b, t: (0, 0)),           # wh = [Whr|Whz|Whn]
        pl.BlockSpec((1, 3 * D), lambda b, t: (0, 0)),           # bh
    ]
    out_specs = [
        pl.BlockSpec((TB, None, K, D), lambda b, t: (b, t, 0, 0)),  # per-turn state slab
        pl.BlockSpec((TB, T, K), lambda b, t: (b, 0, 0)),           # logits  (resident acc.)
        pl.BlockSpec((TB, T, 1), lambda b, t: (b, 0, 0)),           # indices (resident acc.)
    ]
    out_shapes = [
        jax.ShapeDtypeStruct((B, T, K, D), jnp.float32),
        jax.ShapeDtypeStruct((B, T, K), jnp.float32),
        jax.ShapeDtypeStruct((B, T, 1), jnp.int32),
    ]

    out_feats, sample_logits, idx3 = pl.pallas_call(
        kernel,
        out_shape=out_shapes,
        grid_spec=pltpu.PrefetchScalarGridSpec(
            num_scalar_prefetch=0,
            grid=(NB, T),
            in_specs=in_specs,
            out_specs=out_specs,
            scratch_shapes=[pltpu.VMEM((K, TB, D), jnp.float32)],
        ),
        compiler_params=pltpu.CompilerParams(
            dimension_semantics=("parallel", "arbitrary"),
            vmem_limit_bytes=40 * 1024 * 1024),
    )(qproj_all, gi_all, hiddens.astype(jnp.float32),
      p["w1h"], p["w2"], p["b2"], p["w3"], p["b3"], p["wh"], p["bh"])

    next_hiddens = out_feats[:, -1]          # final hidden state (B, K, D); no extra kernel output
    sample_indices = idx3[:, :, 0]           # (B, T) int32
    return out_feats, next_hiddens, sample_logits, sample_indices


# --------------------------------------------------------------------- pure-JAX reference

def reference_forward(txt_feats, hiddens, params, instance_dim, rl_finetune, sample_mode):
    """Non-Pallas reference mirroring the instance_dim > 1 branch (deterministic paths only)."""
    B, T, D = txt_feats.shape
    K = instance_dim
    p = params
    h = hiddens.astype(jnp.float32)                          # (B, K, D)
    outs, logits_all, inds_all = [], [], []
    for t in range(T):
        q = txt_feats[:, t].astype(jnp.float32)              # (B, D)
        # PolicyNet (policy_mode == 0): relu(cat(q, h_k) @ W1 + b1) with W1 split into W1q/W1h.
        qh = jnp.dot(q, p["w1q"], precision=HIGHEST) + p["b1"]
        l1 = jax.nn.relu(qh[:, None, :] +
                         jnp.einsum("bkd,de->bke", h, p["w1h"], precision=HIGHEST))
        l2 = jax.nn.relu(jnp.einsum("bkd,de->bke", l1, p["w2"], precision=HIGHEST) + p["b2"])
        sc = jax.nn.relu(jnp.sum(l2 * p["w3"], axis=-1) + p["b3"][0, 0])          # (B, K)
        if rl_finetune > 0 and sample_mode < 2:
            if t < K:
                inds = jnp.full((B,), t, jnp.int32)
                lg = jnp.ones((B, K), jnp.float32)
            else:
                inds = jnp.argmax(sc, axis=-1).astype(jnp.int32)
                lg = sc
        else:
            if sample_mode == 3:
                inds = jnp.zeros((B,), jnp.int32)
            else:
                inds = jnp.full((B,), t % K, jnp.int32)
            lg = sc
        h_sel = h[jnp.arange(B), inds]                        # (B, D)
        # GRU cell (PyTorch gate convention r, z, n).
        gi = jnp.dot(q, p["wi"], precision=HIGHEST) + p["bi"]
        gh = jnp.dot(h_sel, p["wh"], precision=HIGHEST) + p["bh"]
        r = jax.nn.sigmoid(gi[:, :D] + gh[:, :D])
        z = jax.nn.sigmoid(gi[:, D:2 * D] + gh[:, D:2 * D])
        n = jnp.tanh(gi[:, 2 * D:] + r * gh[:, 2 * D:])
        h_new = (1.0 - z) * n + z * h_sel
        onehot = (jnp.arange(K)[None, :, None] == inds[:, None, None]).astype(jnp.float32)
        h = h * (1.0 - onehot) + h_new[:, None, :] * onehot
        outs.append(h)
        logits_all.append(lg)
        inds_all.append(inds)
    return (jnp.stack(outs, 1), h, jnp.stack(logits_all, 1), jnp.stack(inds_all, 1))


# ------------------------------------------------------------------------------- params

def init_params(key, D):
    """Parameters stored pre-fused in the kernel-friendly layout:
       - policy Linear1 split into query / hidden halves (pre-transposed: x @ W),
       - final projection as a (1, D) row,
       - GRU gate weights concatenated to (D, 3D) as [r | z | n] (pre-transposed),
         gate biases concatenated to (1, 3D)."""
    ks = jax.random.split(key, 11)
    s = 0.1

    def mat(k, shape):
        return (s * jax.random.normal(k, shape)).astype(jnp.float32)

    return {
        # PolicyNet (policy_mode == 0)
        "w1q": mat(ks[0], (D, D)),
        "w1h": mat(ks[1], (D, D)),
        "b1":  mat(ks[2], (1, D)),
        "w2":  mat(ks[3], (D, D)),
        "b2":  mat(ks[4], (1, D)),
        "w3":  mat(ks[5], (1, D)),
        "b3":  mat(ks[6], (1, 1)),
        # GRU cell (PyTorch gate convention, gates ordered r, z, n)
        "wi":  mat(ks[7], (D, 3 * D)),
        "wh":  mat(ks[8], (D, 3 * D)),
        "bi":  mat(ks[9], (1, 3 * D)),
        "bh":  mat(ks[10], (1, 3 * D)),
    }


# --------------------------------------------------------------------------------- main

if __name__ == "__main__":
    B, T, D, K = 2, 6, 32, 3          # bsize, nturns, n_feature_dim, instance_dim
    key = jax.random.PRNGKey(0)
    k_txt, k_hid, k_par = jax.random.split(key, 3)

    txt_feats = jax.random.normal(k_txt, (B, T, D), dtype=jnp.float32)
    hiddens = jax.random.normal(k_hid, (B, K, D), dtype=jnp.float32)
    params = init_params(k_par, D)

    # Path 1: rl_finetune=1, sample_mode=0 (warm-up turns, then top-1 policy selection).
    out_feats, next_hiddens, logits, inds = context_encoder_forward(
        txt_feats, hiddens, params, K, 1, 0)
    jax.block_until_ready((out_feats, next_hiddens, logits, inds))

    assert out_feats.shape == (B, T, K, D)
    assert next_hiddens.shape == (B, K, D)
    assert logits.shape == (B, T, K)
    assert inds.shape == (B, T)

    r_out, r_h, r_logits, r_inds = reference_forward(txt_feats, hiddens, params, K, 1, 0)
    assert jnp.array_equal(inds, r_inds)
    assert jnp.allclose(logits, r_logits, atol=5e-3, rtol=5e-3)
    assert jnp.allclose(out_feats, r_out, atol=5e-3, rtol=5e-3)
    assert jnp.allclose(next_hiddens, r_h, atol=5e-3, rtol=5e-3)
    assert jnp.all(inds[:, :K] == jnp.arange(K, dtype=inds.dtype)[None, :])   # warm-up circular
    assert jnp.allclose(logits[:, :K], 1.0)

    # Path 2: rl_finetune=0, sample_mode=2 (circular selection).
    out2, hid2, logits2, inds2 = context_encoder_forward(
        txt_feats, hiddens, params, K, 0, 2)
    jax.block_until_ready((out2, hid2, logits2, inds2))
    r2 = reference_forward(txt_feats, hiddens, params, K, 0, 2)
    assert jnp.array_equal(inds2, r2[3])
    assert jnp.allclose(out2, r2[0], atol=5e-3, rtol=5e-3)

    print("KERNEL_OK")
</pallas_src>

<mosaic_0001>
module attributes {stable_mosaic.version = 11 : i64} {
  func.func @kernel(%arg0: i32, %arg1: i32, %arg2: memref<2x6x32xf32, #tpu.memory_space<vmem>>, %arg3: memref<2x6x96xf32, #tpu.memory_space<vmem>>, %arg4: memref<2x3x32xf32, #tpu.memory_space<vmem>>, %arg5: memref<32x32xf32, #tpu.memory_space<vmem>>, %arg6: memref<32x32xf32, #tpu.memory_space<vmem>>, %arg7: memref<1x32xf32, #tpu.memory_space<vmem>>, %arg8: memref<1x32xf32, #tpu.memory_space<vmem>>, %arg9: memref<1x1xf32, #tpu.memory_space<vmem>>, %arg10: memref<32x96xf32, #tpu.memory_space<vmem>>, %arg11: memref<1x96xf32, #tpu.memory_space<vmem>>, %arg12: memref<2x1x3x32xf32, #tpu.memory_space<vmem>>, %arg13: memref<2x6x3xf32, #tpu.memory_space<vmem>>, %arg14: memref<2x6x1xi32, #tpu.memory_space<vmem>>, %arg15: memref<3x2x32xf32, #tpu.memory_space<vmem>>) attributes {dimension_semantics = [#tpu.dimension_semantics<parallel>, #tpu.dimension_semantics<arbitrary>], iteration_bounds = array<i64: 1, 6>, scalar_prefetch = 0 : i64, scratch_operands = 1 : i64, tpu.core_type = #tpu.core_type<tc>, window_params = [{transform_indices = @transform_0, window_bounds = array<i64: 2, 6, 32>}, {transform_indices = @transform_1, window_bounds = array<i64: 2, 6, 96>}, {transform_indices = @transform_2, window_bounds = array<i64: 2, 3, 32>}, {pipeline_mode = #tpu.pipeline_mode<synchronous>, transform_indices = @transform_3, window_bounds = array<i64: 32, 32>}, {pipeline_mode = #tpu.pipeline_mode<synchronous>, transform_indices = @transform_4, window_bounds = array<i64: 32, 32>}, {pipeline_mode = #tpu.pipeline_mode<synchronous>, transform_indices = @transform_5, window_bounds = array<i64: 1, 32>}, {pipeline_mode = #tpu.pipeline_mode<synchronous>, transform_indices = @transform_6, window_bounds = array<i64: 1, 32>}, {pipeline_mode = #tpu.pipeline_mode<synchronous>, transform_indices = @transform_7, window_bounds = array<i64: 1, 1>}, {pipeline_mode = #tpu.pipeline_mode<synchronous>, transform_indices = @transform_8, window_bounds = array<i64: 32, 96>}, {pipeline_mode = #tpu.pipeline_mode<synchronous>, transform_indices = @transform_9, window_bounds = array<i64: 1, 96>}, {transform_indices = @transform_10, window_bounds = array<i64: 2, 1, 3, 32>}, {transform_indices = @transform_11, window_bounds = array<i64: 2, 6, 3>}, {transform_indices = @transform_12, window_bounds = array<i64: 2, 6, 1>}]} {
    %c0_i32 = arith.constant 0 : i32
    %0 = arith.cmpi eq, %arg1, %c0_i32 : i32
    %1 = arith.extui %0 : i1 to i32
    %c0_i32_0 = arith.constant 0 : i32
    %2 = arith.cmpi ne, %1, %c0_i32_0 : i32
    scf.if %2 {
      %c0_68 = arith.constant 0 : index
      %c0_69 = arith.constant 0 : index
      %c0_70 = arith.constant 0 : index
      %155 = vector.load %arg4[%c0_68, %c0_69, %c0_70] : memref<2x3x32xf32, #tpu.memory_space<vmem>>, vector<2x1x32xf32>
      %156 = vector.shape_cast %155 : vector<2x1x32xf32> to vector<2x32xf32>
      %c0_71 = arith.constant 0 : index
      %c0_72 = arith.constant 0 : index
      %c0_73 = arith.constant 0 : index
      %157 = vector.load %arg15[%c0_71, %c0_72, %c0_73] : memref<3x2x32xf32, #tpu.memory_space<vmem>>, vector<1x2x32xf32>
      %158 = vector.shape_cast %157 : vector<1x2x32xf32> to vector<2x32xf32>
      %159 = vector.shape_cast %156 : vector<2x32xf32> to vector<1x2x32xf32>
      tpu.vector_store %arg15[%c0_71, %c0_72, %c0_73], %159 {strides = array<i32>} : memref<3x2x32xf32, #tpu.memory_space<vmem>>, vector<1x2x32xf32>,
      %c0_74 = arith.constant 0 : index
      %c1_75 = arith.constant 1 : index
      %c0_76 = arith.constant 0 : index
      %160 = vector.load %arg4[%c0_74, %c1_75, %c0_76] : memref<2x3x32xf32, #tpu.memory_space<vmem>>, vector<2x1x32xf32>
      %161 = vector.shape_cast %160 : vector<2x1x32xf32> to vector<2x32xf32>
      %c1_77 = arith.constant 1 : index
      %c0_78 = arith.constant 0 : index
      %c0_79 = arith.constant 0 : index
      %162 = vector.load %arg15[%c1_77, %c0_78, %c0_79] : memref<3x2x32xf32, #tpu.memory_space<vmem>>, vector<1x2x32xf32>
      %163 = vector.shape_cast %162 : vector<1x2x32xf32> to vector<2x32xf32>
      %164 = vector.shape_cast %161 : vector<2x32xf32> to vector<1x2x32xf32>
      tpu.vector_store %arg15[%c1_77, %c0_78, %c0_79], %164 {strides = array<i32>} : memref<3x2x32xf32, #tpu.memory_space<vmem>>, vector<1x2x32xf32>,
      %c0_80 = arith.constant 0 : index
      %c2_81 = arith.constant 2 : index
      %c0_82 = arith.constant 0 : index
      %165 = vector.load %arg4[%c0_80, %c2_81, %c0_82] : memref<2x3x32xf32, #tpu.memory_space<vmem>>, vector<2x1x32xf32>
      %166 = vector.shape_cast %165 : vector<2x1x32xf32> to vector<2x32xf32>
      %c2_83 = arith.constant 2 : index
      %c0_84 = arith.constant 0 : index
      %c0_85 = arith.constant 0 : index
      %167 = vector.load %arg15[%c2_83, %c0_84, %c0_85] : memref<3x2x32xf32, #tpu.memory_space<vmem>>, vector<1x2x32xf32>
      %168 = vector.shape_cast %167 : vector<1x2x32xf32> to vector<2x32xf32>
      %169 = vector.shape_cast %166 : vector<2x32xf32> to vector<1x2x32xf32>
      tpu.vector_store %arg15[%c2_83, %c0_84, %c0_85], %169 {strides = array<i32>} : memref<3x2x32xf32, #tpu.memory_space<vmem>>, vector<1x2x32xf32>,
    } else {
    }
    %c0 = arith.constant 0 : index
    %3 = arith.index_cast %arg1 : i32 to index
    %c0_1 = arith.constant 0 : index
    %4 = vector.load %arg2[%c0, %3, %c0_1] : memref<2x6x32xf32, #tpu.memory_space<vmem>>, vector<2x1x32xf32>
    %5 = vector.shape_cast %4 : vector<2x1x32xf32> to vector<2x32xf32>
    %c0_2 = arith.constant 0 : index
    %6 = arith.index_cast %arg1 : i32 to index
    %c0_3 = arith.constant 0 : index
    %7 = vector.load %arg3[%c0_2, %6, %c0_3] : memref<2x6x96xf32, #tpu.memory_space<vmem>>, vector<2x1x96xf32>
    %8 = vector.shape_cast %7 : vector<2x1x96xf32> to vector<2x96xf32>
    %c0_4 = arith.constant 0 : index
    %c0_5 = arith.constant 0 : index
    %c0_6 = arith.constant 0 : index
    %9 = vector.load %arg15[%c0_4, %c0_5, %c0_6] : memref<3x2x32xf32, #tpu.memory_space<vmem>>, vector<1x2x32xf32>
    %10 = vector.shape_cast %9 : vector<1x2x32xf32> to vector<2x32xf32>
    %c1 = arith.constant 1 : index
    %c0_7 = arith.constant 0 : index
    %c0_8 = arith.constant 0 : index
    %11 = vector.load %arg15[%c1, %c0_7, %c0_8] : memref<3x2x32xf32, #tpu.memory_space<vmem>>, vector<1x2x32xf32>
    %12 = vector.shape_cast %11 : vector<1x2x32xf32> to vector<2x32xf32>
    %c2 = arith.constant 2 : index
    %c0_9 = arith.constant 0 : index
    %c0_10 = arith.constant 0 : index
    %13 = vector.load %arg15[%c2, %c0_9, %c0_10] : memref<3x2x32xf32, #tpu.memory_space<vmem>>, vector<1x2x32xf32>
    %14 = vector.shape_cast %13 : vector<1x2x32xf32> to vector<2x32xf32>
    %15 = tpu.concatenate %10, %12, %14 in 0 : vector<2x32xf32>, vector<2x32xf32>, vector<2x32xf32> -> vector<6x32xf32>
    %16 = tpu.concatenate %5, %5, %5 in 0 : vector<2x32xf32>, vector<2x32xf32>, vector<2x32xf32> -> vector<6x32xf32>
    %c0_11 = arith.constant 0 : index
    %c0_12 = arith.constant 0 : index
    %17 = vector.load %arg5[%c0_11, %c0_12] : memref<32x32xf32, #tpu.memory_space<vmem>>, vector<32x32xf32>
    %cst = arith.constant dense<0.000000e+00> : vector<6x32xf32>
    %18 = tpu.matmul %15, %17, %cst {dimension_numbers = #tpu.dot_dimension_numbers<[1], [0], [0], [1], [0, 0, 1, 1], [], []>} : vector<6x32xf32>, vector<32x32xf32>, vector<6x32xf32> -> vector<6x32xf32>
    %19 = arith.addf %18, %16 : vector<6x32xf32>
    %cst_13 = arith.constant 0.000000e+00 : f32
    %20 = vector.broadcast %cst_13 : f32 to vector<6x32xf32>
    %21 = arith.maximumf %19, %20 : vector<6x32xf32>
    %c0_14 = arith.constant 0 : index
    %c0_15 = arith.constant 0 : index
    %22 = vector.load %arg6[%c0_14, %c0_15] : memref<32x32xf32, #tpu.memory_space<vmem>>, vector<32x32xf32>
    %cst_16 = arith.constant dense<0.000000e+00> : vector<6x32xf32>
    %23 = tpu.matmul %21, %22, %cst_16 {dimension_numbers = #tpu.dot_dimension_numbers<[1], [0], [0], [1], [0, 0, 1, 1], [], []>} : vector<6x32xf32>, vector<32x32xf32>, vector<6x32xf32> -> vector<6x32xf32>
    %c0_17 = arith.constant 0 : index
    %c0_18 = arith.constant 0 : index
    %24 = vector.load %arg7[%c0_17, %c0_18] : memref<1x32xf32, #tpu.memory_space<vmem>>, vector<1x32xf32>
    %25 = vector.broadcast %24 : vector<1x32xf32> to vector<6x32xf32>
    %26 = arith.addf %23, %25 : vector<6x32xf32>
    %cst_19 = arith.constant 0.000000e+00 : f32
    %27 = vector.broadcast %cst_19 : f32 to vector<6x32xf32>
    %28 = arith.maximumf %26, %27 : vector<6x32xf32>
    %c0_20 = arith.constant 0 : index
    %c0_21 = arith.constant 0 : index
    %29 = vector.load %arg8[%c0_20, %c0_21] : memref<1x32xf32, #tpu.memory_space<vmem>>, vector<1x32xf32>
    %30 = vector.broadcast %29 : vector<1x32xf32> to vector<6x32xf32>
    %31 = arith.mulf %28, %30 : vector<6x32xf32>
    %cst_22 = arith.constant dense<0.000000e+00> : vector<6xf32>
    %32 = vector.multi_reduction <add>, %31, %cst_22 [1] : vector<6x32xf32> to vector<6xf32>
    %33 = vector.shape_cast %32 : vector<6xf32> to vector<6x1xf32>
    %c0_23 = arith.constant 0 : index
    %c0_24 = arith.constant 0 : index
    %34 = vector.load %arg9[%c0_23, %c0_24] : memref<1x1xf32, #tpu.memory_space<vmem>>, vector<1x1xf32>
    %35 = vector.broadcast %34 : vector<1x1xf32> to vector<6x1xf32>
    %36 = arith.addf %33, %35 : vector<6x1xf32>
    %cst_25 = arith.constant 0.000000e+00 : f32
    %37 = vector.broadcast %cst_25 : f32 to vector<6x1xf32>
    %38 = arith.maximumf %36, %37 : vector<6x1xf32>
    %39 = vector.extract_strided_slice %38 {offsets = [0, 0], sizes = [2, 1], strides = [1, 1]} : vector<6x1xf32> to vector<2x1xf32>
    %40 = vector.extract_strided_slice %38 {offsets = [2, 0], sizes = [2, 1], strides = [1, 1]} : vector<6x1xf32> to vector<2x1xf32>
    %41 = vector.extract_strided_slice %38 {offsets = [4, 0], sizes = [2, 1], strides = [1, 1]} : vector<6x1xf32> to vector<2x1xf32>
    %42 = tpu.concatenate %39, %40, %41 in 1 : vector<2x1xf32>, vector<2x1xf32>, vector<2x1xf32> -> vector<2x3xf32>
    %43 = tpu.iota {dimensions = array<i32: 1>} : vector<2x3xi32>
    %cst_26 = arith.constant dense<0xFF800000> : vector<2xf32>
    %44 = vector.multi_reduction <maximumf>, %42, %cst_26 [1] : vector<2x3xf32> to vector<2xf32>
    %45 = vector.shape_cast %44 : vector<2xf32> to vector<2x1xf32>
    %46 = vector.broadcast %45 : vector<2x1xf32> to vector<2x3xf32>
    %47 = arith.cmpf oge, %42, %46 : vector<2x3xf32>
    %c3_i32 = arith.constant 3 : i32
    %48 = vector.broadcast %c3_i32 : i32 to vector<2x3xi32>
    %49 = arith.select %47, %43, %48 : vector<2x3xi1>, vector<2x3xi32>
    %cst_27 = arith.constant dense<2147483647> : vector<2xi32>
    %50 = vector.multi_reduction <minsi>, %49, %cst_27 [1] : vector<2x3xi32> to vector<2xi32>
    %51 = vector.shape_cast %50 : vector<2xi32> to vector<2x1xi32>
    %c3_i32_28 = arith.constant 3 : i32
    %52 = arith.cmpi slt, %arg1, %c3_i32_28 : i32
    %c0_i32_29 = arith.constant 0 : i32
    %53 = vector.broadcast %c0_i32_29 : i32 to vector<2x1xi32>
    %54 = vector.broadcast %arg1 : i32 to vector<2x1xi32>
    %55 = arith.addi %53, %54 : vector<2x1xi32>
    %56 = arith.select %52, %55, %51 : vector<2x1xi32>
    %cst_30 = arith.constant 1.000000e+00 : f32
    %57 = vector.broadcast %cst_30 : f32 to vector<2x3xf32>
    %58 = arith.select %52, %57, %42 : vector<2x3xf32>
    %59 = vector.broadcast %56 : vector<2x1xi32> to vector<2x3xi32>
    %60 = arith.cmpi eq, %43, %59 : vector<2x3xi32>
    %61 = arith.extui %60 : vector<2x3xi1> to vector<2x3xi32>
    %62 = arith.sitofp %61 : vector<2x3xi32> to vector<2x3xf32>
    %cst_31 = arith.constant 0.000000e+00 : f32
    %63 = vector.broadcast %cst_31 : f32 to vector<2x32xf32>
    %64 = vector.extract_strided_slice %62 {offsets = [0, 0], sizes = [2, 1], strides = [1, 1]} : vector<2x3xf32> to vector<2x1xf32>
    %65 = vector.broadcast %64 : vector<2x1xf32> to vector<2x32xf32>
    %66 = arith.mulf %65, %10 : vector<2x32xf32>
    %67 = arith.addf %63, %66 : vector<2x32xf32>
    %68 = vector.extract_strided_slice %62 {offsets = [0, 1], sizes = [2, 1], strides = [1, 1]} : vector<2x3xf32> to vector<2x1xf32>
    %69 = vector.broadcast %68 : vector<2x1xf32> to vector<2x32xf32>
    %70 = arith.mulf %69, %12 : vector<2x32xf32>
    %71 = arith.addf %67, %70 : vector<2x32xf32>
    %72 = vector.extract_strided_slice %62 {offsets = [0, 2], sizes = [2, 1], strides = [1, 1]} : vector<2x3xf32> to vector<2x1xf32>
    %73 = vector.broadcast %72 : vector<2x1xf32> to vector<2x32xf32>
    %74 = arith.mulf %73, %14 : vector<2x32xf32>
    %75 = arith.addf %71, %74 : vector<2x32xf32>
    %c0_32 = arith.constant 0 : index
    %c0_33 = arith.constant 0 : index
    %76 = vector.load %arg10[%c0_32, %c0_33] : memref<32x96xf32, #tpu.memory_space<vmem>>, vector<32x96xf32>
    %cst_34 = arith.constant dense<0.000000e+00> : vector<2x96xf32>
    %77 = tpu.matmul %75, %76, %cst_34 {dimension_numbers = #tpu.dot_dimension_numbers<[1], [0], [0], [1], [0, 0, 1, 1], [], []>} : vector<2x32xf32>, vector<32x96xf32>, vector<2x96xf32> -> vector<2x96xf32>
    %c0_35 = arith.constant 0 : index
    %c0_36 = arith.constant 0 : index
    %78 = vector.load %arg11[%c0_35, %c0_36] : memref<1x96xf32, #tpu.memory_space<vmem>>, vector<1x96xf32>
    %79 = vector.broadcast %78 : vector<1x96xf32> to vector<2x96xf32>
    %80 = arith.addf %77, %79 : vector<2x96xf32>
    %81 = vector.extract_strided_slice %8 {offsets = [0, 0], sizes = [2, 32], strides = [1, 1]} : vector<2x96xf32> to vector<2x32xf32>
    %82 = vector.extract_strided_slice %80 {offsets = [0, 0], sizes = [2, 32], strides = [1, 1]} : vector<2x96xf32> to vector<2x32xf32>
    %83 = arith.addf %81, %82 : vector<2x32xf32>
    %84 = arith.negf %83 : vector<2x32xf32>
    %85 = math.exp %84 : vector<2x32xf32>
    %cst_37 = arith.constant 1.000000e+00 : f32
    %86 = vector.broadcast %cst_37 : f32 to vector<2x32xf32>
    %87 = arith.addf %86, %85 : vector<2x32xf32>
    %88 = arith.divf %86, %87 : vector<2x32xf32>
    %89 = vector.extract_strided_slice %8 {offsets = [0, 32], sizes = [2, 32], strides = [1, 1]} : vector<2x96xf32> to vector<2x32xf32>
    %90 = vector.extract_strided_slice %80 {offsets = [0, 32], sizes = [2, 32], strides = [1, 1]} : vector<2x96xf32> to vector<2x32xf32>
    %91 = arith.addf %89, %90 : vector<2x32xf32>
    %92 = arith.negf %91 : vector<2x32xf32>
    %93 = math.exp %92 : vector<2x32xf32>
    %cst_38 = arith.constant 1.000000e+00 : f32
    %94 = vector.broadcast %cst_38 : f32 to vector<2x32xf32>
    %95 = arith.addf %94, %93 : vector<2x32xf32>
    %96 = arith.divf %94, %95 : vector<2x32xf32>
    %97 = vector.extract_strided_slice %8 {offsets = [0, 64], sizes = [2, 32], strides = [1, 1]} : vector<2x96xf32> to vector<2x32xf32>
    %98 = vector.extract_strided_slice %80 {offsets = [0, 64], sizes = [2, 32], strides = [1, 1]} : vector<2x96xf32> to vector<2x32xf32>
    %99 = arith.mulf %88, %98 : vector<2x32xf32>
    %100 = arith.addf %97, %99 : vector<2x32xf32>
    %101 = math.tanh %100 : vector<2x32xf32>
    %cst_39 = arith.constant 1.000000e+00 : f32
    %102 = vector.broadcast %cst_39 : f32 to vector<2x32xf32>
    %103 = arith.subf %102, %96 : vector<2x32xf32>
    %104 = arith.mulf %103, %101 : vector<2x32xf32>
    %105 = arith.mulf %96, %75 : vector<2x32xf32>
    %106 = arith.addf %104, %105 : vector<2x32xf32>
    %107 = vector.extract_strided_slice %62 {offsets = [0, 0], sizes = [2, 1], strides = [1, 1]} : vector<2x3xf32> to vector<2x1xf32>
    %cst_40 = arith.constant 1.000000e+00 : f32
    %108 = vector.broadcast %cst_40 : f32 to vector<2x1xf32>
    %109 = arith.subf %108, %107 : vector<2x1xf32>
    %110 = vector.broadcast %109 : vector<2x1xf32> to vector<2x32xf32>
    %111 = arith.mulf %10, %110 : vector<2x32xf32>
    %112 = vector.broadcast %107 : vector<2x1xf32> to vector<2x32xf32>
    %113 = arith.mulf %106, %112 : vector<2x32xf32>
    %114 = arith.addf %111, %113 : vector<2x32xf32>
    %c0_41 = arith.constant 0 : index
    %c0_42 = arith.constant 0 : index
    %c0_43 = arith.constant 0 : index
    %115 = vector.load %arg15[%c0_41, %c0_42, %c0_43] : memref<3x2x32xf32, #tpu.memory_space<vmem>>, vector<1x2x32xf32>
    %116 = vector.shape_cast %115 : vector<1x2x32xf32> to vector<2x32xf32>
    %117 = vector.shape_cast %114 : vector<2x32xf32> to vector<1x2x32xf32>
    tpu.vector_store %arg15[%c0_41, %c0_42, %c0_43], %117 {strides = array<i32>} : memref<3x2x32xf32, #tpu.memory_space<vmem>>, vector<1x2x32xf32>,
    %c0_44 = arith.constant 0 : index
    %c0_45 = arith.constant 0 : index
    %c0_46 = arith.constant 0 : index
    %c0_47 = arith.constant 0 : index
    %118 = vector.load %arg12[%c0_44, %c0_45, %c0_46, %c0_47] : memref<2x1x3x32xf32, #tpu.memory_space<vmem>>, vector<2x1x1x32xf32>
    %119 = vector.shape_cast %118 : vector<2x1x1x32xf32> to vector<2x32xf32>
    %120 = vector.shape_cast %114 : vector<2x32xf32> to vector<2x1x1x32xf32>
    tpu.vector_store %arg12[%c0_44, %c0_45, %c0_46, %c0_47], %120 {strides = array<i32>} : memref<2x1x3x32xf32, #tpu.memory_space<vmem>>, vector<2x1x1x32xf32>,
    %121 = vector.extract_strided_slice %62 {offsets = [0, 1], sizes = [2, 1], strides = [1, 1]} : vector<2x3xf32> to vector<2x1xf32>
    %cst_48 = arith.constant 1.000000e+00 : f32
    %122 = vector.broadcast %cst_48 : f32 to vector<2x1xf32>
    %123 = arith.subf %122, %121 : vector<2x1xf32>
    %124 = vector.broadcast %123 : vector<2x1xf32> to vector<2x32xf32>
    %125 = arith.mulf %12, %124 : vector<2x32xf32>
    %126 = vector.broadcast %121 : vector<2x1xf32> to vector<2x32xf32>
    %127 = arith.mulf %106, %126 : vector<2x32xf32>
    %128 = arith.addf %125, %127 : vector<2x32xf32>
    %c1_49 = arith.constant 1 : index
    %c0_50 = arith.constant 0 : index
    %c0_51 = arith.constant 0 : index
    %129 = vector.load %arg15[%c1_49, %c0_50, %c0_51] : memref<3x2x32xf32, #tpu.memory_space<vmem>>, vector<1x2x32xf32>
    %130 = vector.shape_cast %129 : vector<1x2x32xf32> to vector<2x32xf32>
    %131 = vector.shape_cast %128 : vector<2x32xf32> to vector<1x2x32xf32>
    tpu.vector_store %arg15[%c1_49, %c0_50, %c0_51], %131 {strides = array<i32>} : memref<3x2x32xf32, #tpu.memory_space<vmem>>, vector<1x2x32xf32>,
    %c0_52 = arith.constant 0 : index
    %c0_53 = arith.constant 0 : index
    %c1_54 = arith.constant 1 : index
    %c0_55 = arith.constant 0 : index
    %132 = vector.load %arg12[%c0_52, %c0_53, %c1_54, %c0_55] : memref<2x1x3x32xf32, #tpu.memory_space<vmem>>, vector<2x1x1x32xf32>
    %133 = vector.shape_cast %132 : vector<2x1x1x32xf32> to vector<2x32xf32>
    %134 = vector.shape_cast %128 : vector<2x32xf32> to vector<2x1x1x32xf32>
    tpu.vector_store %arg12[%c0_52, %c0_53, %c1_54, %c0_55], %134 {strides = array<i32>} : memref<2x1x3x32xf32, #tpu.memory_space<vmem>>, vector<2x1x1x32xf32>,
    %135 = vector.extract_strided_slice %62 {offsets = [0, 2], sizes = [2, 1], strides = [1, 1]} : vector<2x3xf32> to vector<2x1xf32>
    %cst_56 = arith.constant 1.000000e+00 : f32
    %136 = vector.broadcast %cst_56 : f32 to vector<2x1xf32>
    %137 = arith.subf %136, %135 : vector<2x1xf32>
    %138 = vector.broadcast %137 : vector<2x1xf32> to vector<2x32xf32>
    %139 = arith.mulf %14, %138 : vector<2x32xf32>
    %140 = vector.broadcast %135 : vector<2x1xf32> to vector<2x32xf32>
    %141 = arith.mulf %106, %140 : vector<2x32xf32>
    %142 = arith.addf %139, %141 : vector<2x32xf32>
    %c2_57 = arith.constant 2 : index
    %c0_58 = arith.constant 0 : index
    %c0_59 = arith.constant 0 : index
    %143 = vector.load %arg15[%c2_57, %c0_58, %c0_59] : memref<3x2x32xf32, #tpu.memory_space<vmem>>, vector<1x2x32xf32>
    %144 = vector.shape_cast %143 : vector<1x2x32xf32> to vector<2x32xf32>
    %145 = vector.shape_cast %142 : vector<2x32xf32> to vector<1x2x32xf32>
    tpu.vector_store %arg15[%c2_57, %c0_58, %c0_59], %145 {strides = array<i32>} : memref<3x2x32xf32, #tpu.memory_space<vmem>>, vector<1x2x32xf32>,
    %c0_60 = arith.constant 0 : index
    %c0_61 = arith.constant 0 : index
    %c2_62 = arith.constant 2 : index
    %c0_63 = arith.constant 0 : index
    %146 = vector.load %arg12[%c0_60, %c0_61, %c2_62, %c0_63] : memref<2x1x3x32xf32, #tpu.memory_space<vmem>>, vector<2x1x1x32xf32>
    %147 = vector.shape_cast %146 : vector<2x1x1x32xf32> to vector<2x32xf32>
    %148 = vector.shape_cast %142 : vector<2x32xf32> to vector<2x1x1x32xf32>
    tpu.vector_store %arg12[%c0_60, %c0_61, %c2_62, %c0_63], %148 {strides = array<i32>} : memref<2x1x3x32xf32, #tpu.memory_space<vmem>>, vector<2x1x1x32xf32>,
    %149 = vector.shape_cast %58 : vector<2x3xf32> to vector<2x1x3xf32>
    %c0_64 = arith.constant 0 : index
    %150 = arith.index_cast %arg1 : i32 to index
    %c0_65 = arith.constant 0 : index
    %151 = vector.load %arg13[%c0_64, %150, %c0_65] : memref<2x6x3xf32, #tpu.memory_space<vmem>>, vector<2x1x3xf32>
    tpu.vector_store %arg13[%c0_64, %150, %c0_65], %149 {strides = array<i32>} : memref<2x6x3xf32, #tpu.memory_space<vmem>>, vector<2x1x3xf32>,
    %152 = vector.shape_cast %56 : vector<2x1xi32> to vector<2x1x1xi32>
    %c0_66 = arith.constant 0 : index
    %153 = arith.index_cast %arg1 : i32 to index
    %c0_67 = arith.constant 0 : index
    %154 = vector.load %arg14[%c0_66, %153, %c0_67] : memref<2x6x1xi32, #tpu.memory_space<vmem>>, vector<2x1x1xi32>
    tpu.vector_store %arg14[%c0_66, %153, %c0_67], %152 {strides = array<i32>} : memref<2x6x1xi32, #tpu.memory_space<vmem>>, vector<2x1x1xi32>,
    return
  }
  func.func @transform_0(%arg0: i32, %arg1: i32) -> (i32, i32, i32) {
    %c0_i32 = arith.constant 0 : i32
    %c0_i32_0 = arith.constant 0 : i32
    %c0_i32_1 = arith.constant 0 : i32
    return %arg0, %c0_i32, %c0_i32_0 : i32, i32, i32
  }
  func.func @transform_1(%arg0: i32, %arg1: i32) -> (i32, i32, i32) {
    %c0_i32 = arith.constant 0 : i32
    %c0_i32_0 = arith.constant 0 : i32
    %c0_i32_1 = arith.constant 0 : i32
    return %arg0, %c0_i32, %c0_i32_0 : i32, i32, i32
  }
  func.func @transform_2(%arg0: i32, %arg1: i32) -> (i32, i32, i32) {
    %c0_i32 = arith.constant 0 : i32
    %c0_i32_0 = arith.constant 0 : i32
    %c0_i32_1 = arith.constant 0 : i32
    return %arg0, %c0_i32, %c0_i32_0 : i32, i32, i32
  }
  func.func @transform_3(%arg0: i32, %arg1: i32) -> (i32, i32) {
    %c0_i32 = arith.constant 0 : i32
    %c0_i32_0 = arith.constant 0 : i32
    %c0_i32_1 = arith.constant 0 : i32
    return %c0_i32, %c0_i32_0 : i32, i32
  }
  func.func @transform_4(%arg0: i32, %arg1: i32) -> (i32, i32) {
    %c0_i32 = arith.constant 0 : i32
    %c0_i32_0 = arith.constant 0 : i32
    %c0_i32_1 = arith.constant 0 : i32
    return %c0_i32, %c0_i32_0 : i32, i32
  }
  func.func @transform_5(%arg0: i32, %arg1: i32) -> (i32, i32) {
    %c0_i32 = arith.constant 0 : i32
    %c0_i32_0 = arith.constant 0 : i32
    %c0_i32_1 = arith.constant 0 : i32
    return %c0_i32, %c0_i32_0 : i32, i32
  }
  func.func @transform_6(%arg0: i32, %arg1: i32) -> (i32, i32) {
    %c0_i32 = arith.constant 0 : i32
    %c0_i32_0 = arith.constant 0 : i32
    %c0_i32_1 = arith.constant 0 : i32
    return %c0_i32, %c0_i32_0 : i32, i32
  }
  func.func @transform_7(%arg0: i32, %arg1: i32) -> (i32, i32) {
    %c0_i32 = arith.constant 0 : i32
    %c0_i32_0 = arith.constant 0 : i32
    %c0_i32_1 = arith.constant 0 : i32
    return %c0_i32, %c0_i32_0 : i32, i32
  }
  func.func @transform_8(%arg0: i32, %arg1: i32) -> (i32, i32) {
    %c0_i32 = arith.constant 0 : i32
    %c0_i32_0 = arith.constant 0 : i32
    %c0_i32_1 = arith.constant 0 : i32
    return %c0_i32, %c0_i32_0 : i32, i32
  }
  func.func @transform_9(%arg0: i32, %arg1: i32) -> (i32, i32) {
    %c0_i32 = arith.constant 0 : i32
    %c0_i32_0 = arith.constant 0 : i32
    %c0_i32_1 = arith.constant 0 : i32
    return %c0_i32, %c0_i32_0 : i32, i32
  }
  func.func @transform_10(%arg0: i32, %arg1: i32) -> (i32, i32, i32, i32) {
    %c0_i32 = arith.constant 0 : i32
    %c0_i32_0 = arith.constant 0 : i32
    %c0_i32_1 = arith.constant 0 : i32
    return %arg0, %arg1, %c0_i32, %c0_i32_0 : i32, i32, i32, i32
  }
  func.func @transform_11(%arg0: i32, %arg1: i32) -> (i32, i32, i32) {
    %c0_i32 = arith.constant 0 : i32
    %c0_i32_0 = arith.constant 0 : i32
    %c0_i32_1 = arith.constant 0 : i32
    return %arg0, %c0_i32, %c0_i32_0 : i32, i32, i32
  }
  func.func @transform_12(%arg0: i32, %arg1: i32) -> (i32, i32, i32) {
    %c0_i32 = arith.constant 0 : i32
    %c0_i32_0 = arith.constant 0 : i32
    %c0_i32_1 = arith.constant 0 : i32
    return %arg0, %c0_i32, %c0_i32_0 : i32, i32, i32
  }
}

</mosaic_0001>

<llo_original>
// kernel: context_encoder_forward.1
$region0: #{context_encoder_forward.1}
  #allocation0 [shape = 'u32[]', space=smem, size = 0x4, offset = 0x4, fixed_abs, tag = 'smem constant byte address 0x4 - core index']
  #allocation1 [shape = 'u32[72,128]{1,0:T(1,128)}', space=vmem, size = 0x9000, scoped, tag = 'internal scratch']
  #allocation2 [shape = 'f32[3,2,32]{2,1,0:T(2,128)}', space=vmem, size = 0xc00, scoped, tag = 'scratch operand']
  #allocation3 [shape = 'f32[1,1]{1,0:T(1,128)S(1)}', space=vmem, size = 0x200, scoped, tag = 'scoped memory for context_encoder_forward.1']
  %s0 = inlined_call_operand.vmem [shape: f32[2,6,32], index: 0, kind: input, shape index: {}]
  %s1 = inlined_call_operand.vmem [shape: f32[2,6,96], index: 1, kind: input, shape index: {}]
  %s2 = inlined_call_operand.vmem [shape: f32[2,3,32], index: 2, kind: input, shape index: {}]
  %s3 = inlined_call_operand.vmem [shape: f32[32,32], index: 3, kind: input, shape index: {}]
  %s4 = inlined_call_operand.vmem [shape: f32[32,32], index: 4, kind: input, shape index: {}]
  %s5 = inlined_call_operand.vmem [shape: f32[1,32], index: 5, kind: input, shape index: {}]
  %s6 = inlined_call_operand.vmem [shape: f32[1,32], index: 6, kind: input, shape index: {}]
  %s7 = inlined_call_operand.<no memory space> [shape: f32[1,1], index: 7, kind: input, shape index: {}]
  %s8 = inlined_call_operand.vmem [shape: f32[32,96], index: 8, kind: input, shape index: {}]
  %s9 = inlined_call_operand.vmem [shape: f32[1,96], index: 9, kind: input, shape index: {}]
  %s10 = inlined_call_operand.vmem [shape: f32[2,6,3,32], index: 10, kind: output, shape index: {0}]
  %s11 = inlined_call_operand.vmem [shape: f32[2,6,3], index: 11, kind: output, shape index: {1}]
  %s12 = inlined_call_operand.vmem [shape: s32[2,6,1], index: 12, kind: output, shape index: {2}]
  %13 = xla_tuple %s10, %s11, %s12
  %s14 = sld [smem:[#allocation0]]
  $region130: #{context_encoder_forward.1} parent=0
    _
  %s16 = ssub.s32 1, %s14
  %s17 = scalar_select 0, %s16, %s14
  %v18 = vstv %s7
  %19 = vst [vmem:[#allocation3] sm:$0x1] %v18
  $region1: #{context_encoder_forward.1} parent=0
    #allocation4 [shape = 'u8[8192]{0}', space=vmem, size = 0x2000, scoped, tag = 'output window, operand 0']
    loop: start=0, step=1, limit=8
    $region2: #{context_encoder_forward.1} parent=1 // loop_pre_header
      _
    $region3: #{context_encoder_forward.1} parent=1 // loop_header
      %s21 = sphi 0, %s25
      %p22 = scmp.ge.s32.totalorder %s21, 8
      %s28 = sphi 0, %s40
      %s29 = sphi 0, %s36
      %s30 = sphi 0, %s28
      %s31 = sphi 0, %s29
      %s32 = sphi 0, %s30
      %s33 = sphi 0, %s31
      %s43 = sphi 0, %s45
      %s46 = sphi 0, %s43
      %s47 = sphi 0, %s46
      %s63 = sphi 0, %s47
      %s69 = sphi 0, %s71
      %s72 = sphi 0, %s69
      %s73 = sphi 0, %s72
      %s89 = sphi 0, %s73
      %s95 = sphi 0, %s97
      %s98 = sphi 0, %s95
      %s99 = sphi 0, %s98
      %s115 = sphi 0, %s99
      %s119 = sphi 0, %s119
      %s121 = sphi 0, %s119
      %s122 = sphi 0, %s121
      %s136 = sphi 0, %s122
      %s140 = sphi 0, %s140
      %s142 = sphi 0, %s140
      %s143 = sphi 0, %s142
      %s157 = sphi 0, %s143
      %s161 = sphi 0, %s161
      %s163 = sphi 0, %s161
      %s164 = sphi 0, %s163
      %s178 = sphi 0, %s164
      %s182 = sphi 0, %s182
      %s184 = sphi 0, %s182
      %s185 = sphi 0, %s184
      %s199 = sphi 0, %s185
      %s203 = sphi 0, %s203
      %s205 = sphi 0, %s203
      %s206 = sphi 0, %s205
      %s220 = sphi 0, %s206
      %s224 = sphi 0, %s224
      %s226 = sphi 0, %s224
      %s227 = sphi 0, %s226
      %s241 = sphi 0, %s227
      %s245 = sphi 0, %s245
      %s247 = sphi 0, %s245
      %s248 = sphi 0, %s247
      %s262 = sphi 0, %s248
      %s270 = sphi 0, %s272
      %s273 = sphi 0, %s270
      %s274 = sphi 0, %s273
      %s290 = sphi 0, %s274
      %s296 = sphi 0, %s298
      %s299 = sphi 0, %s296
      %s300 = sphi 0, %s299
      %s316 = sphi 0, %s300
      %s322 = sphi 0, %s324
      %s325 = sphi 0, %s322
      %s326 = sphi 0, %s325
      %s342 = sphi 0, %s326
    $region4: #{context_encoder_forward.1} parent=1 // loop_header_branch
      %24 = sbr.rel (%p22) target = $region8
    $region5: #{context_encoder_forward.1} parent=1 // loop_body
      %s26 = ssub.s32 %s21, 1
      %s27 = ssub.s32 %s21, 2
      %s34 = sadd.s32 1, %s29
      %p35 = scmp.ge.s32.totalorder %s34, 6
      %s36 = scalar_select %p35, 0, %s34
      %s37 = sadd.s32 1, %s28
      %s38 = scalar_select %p35, %s37, %s28
      %p39 = scmp.ge.s32.totalorder %s38, 1
      %s40 = scalar_select %p39, 0, %s38
      %s41 = ssub.s32 %s28, %s40
      %p42 = scmp.eq.s32.totalorder %s41, 0
      %s44 = sadd.s32 %s43, 1
      %s45 = scalar_select %p42, %s43, %s44
      %p48 = pneg %p42
      %p49 = scmp.eq.s32.totalorder %s21, 5
      %p50 = por %p48, %p49
      %p51 = scmp.ne.s32.totalorder %s43, %s46
      %p52 = scmp.eq.s32.totalorder %s21, 0
      %p53 = por %p51, %p52
      %p54 = scmp.ne.s32.totalorder %s43, %s46
      %p55 = scmp.eq.s32.totalorder %s26, 5
      %p56 = por %p54, %p55
      %p57 = scmp.ne.s32.totalorder %s46, %s47
      %p58 = scmp.eq.s32.totalorder %s26, 0
      %p59 = por %p57, %p58
      %p60 = scmp.ne.s32.totalorder %s46, %s47
      %p61 = scmp.eq.s32.totalorder %s27, 5
      %p62 = por %p60, %p61
      %p64 = scmp.ne.s32.totalorder %s47, %s63
      %p65 = scmp.eq.s32.totalorder %s27, 0
      %p66 = por %p64, %p65
      %s67 = ssub.s32 %s28, %s40
      %p68 = scmp.eq.s32.totalorder %s67, 0
      %s70 = sadd.s32 %s69, 1
      %s71 = scalar_select %p68, %s69, %s70
      %p74 = pneg %p68
      %p75 = scmp.eq.s32.totalorder %s21, 5
      %p76 = por %p74, %p75
      %p77 = scmp.ne.s32.totalorder %s69, %s72
      %p78 = scmp.eq.s32.totalorder %s21, 0
      %p79 = por %p77, %p78
      %p80 = scmp.ne.s32.totalorder %s69, %s72
      %p81 = scmp.eq.s32.totalorder %s26, 5
      %p82 = por %p80, %p81
      %p83 = scmp.ne.s32.totalorder %s72, %s73
      %p84 = scmp.eq.s32.totalorder %s26, 0
      %p85 = por %p83, %p84
      %p86 = scmp.ne.s32.totalorder %s72, %s73
      %p87 = scmp.eq.s32.totalorder %s27, 5
      %p88 = por %p86, %p87
      %p90 = scmp.ne.s32.totalorder %s73, %s89
      %p91 = scmp.eq.s32.totalorder %s27, 0
      %p92 = por %p90, %p91
      %s93 = ssub.s32 %s28, %s40
      %p94 = scmp.eq.s32.totalorder %s93, 0
      %s96 = sadd.s32 %s95, 1
      %s97 = scalar_select %p94, %s95, %s96
      %p100 = pneg %p94
      %p101 = scmp.eq.s32.totalorder %s21, 5
      %p102 = por %p100, %p101
      %p103 = scmp.ne.s32.totalorder %s95, %s98
      %p104 = scmp.eq.s32.totalorder %s21, 0
      %p105 = por %p103, %p104
      %p106 = scmp.ne.s32.totalorder %s95, %s98
      %p107 = scmp.eq.s32.totalorder %s26, 5
      %p108 = por %p106, %p107
      %p109 = scmp.ne.s32.totalorder %s98, %s99
      %p110 = scmp.eq.s32.totalorder %s26, 0
      %p111 = por %p109, %p110
      %p112 = scmp.ne.s32.totalorder %s98, %s99
      %p113 = scmp.eq.s32.totalorder %s27, 5
      %p114 = por %p112, %p113
      %p116 = scmp.ne.s32.totalorder %s99, %s115
      %p117 = scmp.eq.s32.totalorder %s27, 0
      %p118 = por %p116, %p117
      %s120 = sadd.s32 %s119, 1
      %p123 = scmp.eq.s32.totalorder %s21, 5
      %p124 = scmp.ne.s32.totalorder %s119, %s121
      %p125 = scmp.eq.s32.totalorder %s21, 0
      %p126 = por %p124, %p125
      %p127 = scmp.ne.s32.totalorder %s119, %s121
      %p128 = scmp.eq.s32.totalorder %s26, 5
      %p129 = por %p127, %p128
      %p130 = scmp.ne.s32.totalorder %s121, %s122
      %p131 = scmp.eq.s32.totalorder %s26, 0
      %p132 = por %p130, %p131
      %p133 = scmp.ne.s32.totalorder %s121, %s122
      %p134 = scmp.eq.s32.totalorder %s27, 5
      %p135 = por %p133, %p134
      %p137 = scmp.ne.s32.totalorder %s122, %s136
      %p138 = scmp.eq.s32.totalorder %s27, 0
      %p139 = por %p137, %p138
      %s141 = sadd.s32 %s140, 1
      %p144 = scmp.eq.s32.totalorder %s21, 5
      %p145 = scmp.ne.s32.totalorder %s140, %s142
      %p146 = scmp.eq.s32.totalorder %s21, 0
      %p147 = por %p145, %p146
      %p148 = scmp.ne.s32.totalorder %s140, %s142
      %p149 = scmp.eq.s32.totalorder %s26, 5
      %p150 = por %p148, %p149
      %p151 = scmp.ne.s32.totalorder %s142, %s143
      %p152 = scmp.eq.s32.totalorder %s26, 0
      %p153 = por %p151, %p152
      %p154 = scmp.ne.s32.totalorder %s142, %s143
      %p155 = scmp.eq.s32.totalorder %s27, 5
      %p156 = por %p154, %p155
      %p158 = scmp.ne.s32.totalorder %s143, %s157
      %p159 = scmp.eq.s32.totalorder %s27, 0
      %p160 = por %p158, %p159
      %s162 = sadd.s32 %s161, 1
      %p165 = scmp.eq.s32.totalorder %s21, 5
      %p166 = scmp.ne.s32.totalorder %s161, %s163
      %p167 = scmp.eq.s32.totalorder %s21, 0
      %p168 = por %p166, %p167
      %p169 = scmp.ne.s32.totalorder %s161, %s163
      %p170 = scmp.eq.s32.totalorder %s26, 5
      %p171 = por %p169, %p170
      %p172 = scmp.ne.s32.totalorder %s163, %s164
      %p173 = scmp.eq.s32.totalorder %s26, 0
      %p174 = por %p172, %p173
      %p175 = scmp.ne.s32.totalorder %s163, %s164
      %p176 = scmp.eq.s32.totalorder %s27, 5
      %p177 = por %p175, %p176
      %p179 = scmp.ne.s32.totalorder %s164, %s178
      %p180 = scmp.eq.s32.totalorder %s27, 0
      %p181 = por %p179, %p180
      %s183 = sadd.s32 %s182, 1
      %p186 = scmp.eq.s32.totalorder %s21, 5
      %p187 = scmp.ne.s32.totalorder %s182, %s184
      %p188 = scmp.eq.s32.totalorder %s21, 0
      %p189 = por %p187, %p188
      %p190 = scmp.ne.s32.totalorder %s182, %s184
      %p191 = scmp.eq.s32.totalorder %s26, 5
      %p192 = por %p190, %p191
      %p193 = scmp.ne.s32.totalorder %s184, %s185
      %p194 = scmp.eq.s32.totalorder %s26, 0
      %p195 = por %p193, %p194
      %p196 = scmp.ne.s32.totalorder %s184, %s185
      %p197 = scmp.eq.s32.totalorder %s27, 5
      %p198 = por %p196, %p197
      %p200 = scmp.ne.s32.totalorder %s185, %s199
      %p201 = scmp.eq.s32.totalorder %s27, 0
      %p202 = por %p200, %p201
      %s204 = sadd.s32 %s203, 1
      %p207 = scmp.eq.s32.totalorder %s21, 5
      %p208 = scmp.ne.s32.totalorder %s203, %s205
      %p209 = scmp.eq.s32.totalorder %s21, 0
      %p210 = por %p208, %p209
      %p211 = scmp.ne.s32.totalorder %s203, %s205
      %p212 = scmp.eq.s32.totalorder %s26, 5
      %p213 = por %p211, %p212
      %p214 = scmp.ne.s32.totalorder %s205, %s206
      %p215 = scmp.eq.s32.totalorder %s26, 0
      %p216 = por %p214, %p215
      %p217 = scmp.ne.s32.totalorder %s205, %s206
      %p218 = scmp.eq.s32.totalorder %s27, 5
      %p219 = por %p217, %p218
      %p221 = scmp.ne.s32.totalorder %s206, %s220
      %p222 = scmp.eq.s32.totalorder %s27, 0
      %p223 = por %p221, %p222
      %s225 = sadd.s32 %s224, 1
      %p228 = scmp.eq.s32.totalorder %s21, 5
      %p229 = scmp.ne.s32.totalorder %s224, %s226
      %p230 = scmp.eq.s32.totalorder %s21, 0
      %p231 = por %p229, %p230
      %p232 = scmp.ne.s32.totalorder %s224, %s226
      %p233 = scmp.eq.s32.totalorder %s26, 5
      %p234 = por %p232, %p233
      %p235 = scmp.ne.s32.totalorder %s226, %s227
      %p236 = scmp.eq.s32.totalorder %s26, 0
      %p237 = por %p235, %p236
      %p238 = scmp.ne.s32.totalorder %s226, %s227
      %p239 = scmp.eq.s32.totalorder %s27, 5
      %p240 = por %p238, %p239
      %p242 = scmp.ne.s32.totalorder %s227, %s241
      %p243 = scmp.eq.s32.totalorder %s27, 0
      %p244 = por %p242, %p243
      %s246 = sadd.s32 %s245, 1
      %p249 = scmp.eq.s32.totalorder %s21, 5
      %p250 = scmp.ne.s32.totalorder %s245, %s247
      %p251 = scmp.eq.s32.totalorder %s21, 0
      %p252 = por %p250, %p251
      %p253 = scmp.ne.s32.totalorder %s245, %s247
      %p254 = scmp.eq.s32.totalorder %s26, 5
      %p255 = por %p253, %p254
      %p256 = scmp.ne.s32.totalorder %s247, %s248
      %p257 = scmp.eq.s32.totalorder %s26, 0
      %p258 = por %p256, %p257
      %p259 = scmp.ne.s32.totalorder %s247, %s248
      %p260 = scmp.eq.s32.totalorder %s27, 5
      %p261 = por %p259, %p260
      %p263 = scmp.ne.s32.totalorder %s248, %s262
      %p264 = scmp.eq.s32.totalorder %s27, 0
      %p265 = por %p263, %p264
      %s266 = ssub.s32 %s28, %s40
      %s267 = ssub.s32 %s29, %s36
      %s268 = sor.u32 %s266, %s267
      %p269 = scmp.eq.s32.totalorder %s268, 0
      %s271 = sadd.s32 %s270, 1
      %s272 = scalar_select %p269, %s270, %s271
      %p275 = pneg %p269
      %p276 = scmp.eq.s32.totalorder %s21, 5
      %p277 = por %p275, %p276
      %p278 = scmp.ne.s32.totalorder %s270, %s273
      %p279 = scmp.eq.s32.totalorder %s21, 0
      %p280 = por %p278, %p279
      %p281 = scmp.ne.s32.totalorder %s270, %s273
      %p282 = scmp.eq.s32.totalorder %s26, 5
      %p283 = por %p281, %p282
      %p284 = scmp.ne.s32.totalorder %s273, %s274
      %p285 = scmp.eq.s32.totalorder %s26, 0
      %p286 = por %p284, %p285
      %p287 = scmp.ne.s32.totalorder %s273, %s274
      %p288 = scmp.eq.s32.totalorder %s27, 5
      %p289 = por %p287, %p288
      %p291 = scmp.ne.s32.totalorder %s274, %s290
      %p292 = scmp.eq.s32.totalorder %s27, 0
      %p293 = por %p291, %p292
      %s294 = ssub.s32 %s28, %s40
      %p295 = scmp.eq.s32.totalorder %s294, 0
      %s297 = sadd.s32 %s296, 1
      %s298 = scalar_select %p295, %s296, %s297
      %p301 = pneg %p295
      %p302 = scmp.eq.s32.totalorder %s21, 5
      %p303 = por %p301, %p302
      %p304 = scmp.ne.s32.totalorder %s296, %s299
      %p305 = scmp.eq.s32.totalorder %s21, 0
      %p306 = por %p304, %p305
      %p307 = scmp.ne.s32.totalorder %s296, %s299
      %p308 = scmp.eq.s32.totalorder %s26, 5
      %p309 = por %p307, %p308
      %p310 = scmp.ne.s32.totalorder %s299, %s300
      %p311 = scmp.eq.s32.totalorder %s26, 0
      %p312 = por %p310, %p311
      %p313 = scmp.ne.s32.totalorder %s299, %s300
      %p314 = scmp.eq.s32.totalorder %s27, 5
      %p315 = por %p313, %p314
      %p317 = scmp.ne.s32.totalorder %s300, %s316
      %p318 = scmp.eq.s32.totalorder %s27, 0
      %p319 = por %p317, %p318
      %s320 = ssub.s32 %s28, %s40
      %p321 = scmp.eq.s32.totalorder %s320, 0
      %s323 = sadd.s32 %s322, 1
      %s324 = scalar_select %p321, %s322, %s323
      %p327 = pneg %p321
      %p328 = scmp.eq.s32.totalorder %s21, 5
      %p329 = por %p327, %p328
      %p330 = scmp.ne.s32.totalorder %s322, %s325
      %p331 = scmp.eq.s32.totalorder %s21, 0
      %p332 = por %p330, %p331
      %p333 = scmp.ne.s32.totalorder %s322, %s325
      %p334 = scmp.eq.s32.totalorder %s26, 5
      %p335 = por %p333, %p334
      %p336 = scmp.ne.s32.totalorder %s325, %s326
      %p337 = scmp.eq.s32.totalorder %s26, 0
      %p338 = por %p336, %p337
      %p339 = scmp.ne.s32.totalorder %s325, %s326
      %p340 = scmp.eq.s32.totalorder %s27, 5
      %p341 = por %p339, %p340
      %p343 = scmp.ne.s32.totalorder %s326, %s342
      %p344 = scmp.eq.s32.totalorder %s27, 0
      %p345 = por %p343, %p344
      %p346 = scmp.le.s32.totalorder 1, %s21
      %p347 = scmp.lt.s32.totalorder %s21, 7
      %p348 = pnand %p346, %p347
      %p349 = pneg %p348
      // Predicated region
      $region9: #{context_encoder_forward.1} parent=5 // pred_check
        _
      $region10: #{context_encoder_forward.1} parent=5 // pred_check_branch
        %351 = sbr.rel (%p348) target = $region12
      $region11: #{context_encoder_forward.1} parent=5 // pred_region
        %s352 = ssub.s32 %s21, 1
        // Predicated region
        $region13: #{context_encoder_forward.1} parent=11 // pred_check
          %p353 = pneg %p59
        $region14: #{context_encoder_forward.1} parent=11 // pred_check_branch
          %355 = sbr.rel (%p353) target = $region16
        $region15: #{context_encoder_forward.1} parent=11 // pred_region
          %s356 = smul.u32 2, %s30
          %p357 = scmp.lt.s32.totalorder %s356, 1
          %s358 = scalar_select %p357, %s356, 1
          %s359 = smul.addr %s358, 8
          %s360 = scalar_lea.vmem %s0, %s359
          %s361 = smul.u32 2, %s30
        $region16: #{context_encoder_forward.1} parent=11 // pred_fallthru
          _
        // Predicated region
        $region17: #{context_encoder_forward.1} parent=11 // pred_check
          %p362 = pneg %p85
        $region18: #{context_encoder_forward.1} parent=11 // pred_check_branch
          %364 = sbr.rel (%p362) target = $region20
        $region19: #{context_encoder_forward.1} parent=11 // pred_region
          %s365 = smul.u32 2, %s30
          %p366 = scmp.lt.s32.totalorder %s365, 1
          %s367 = scalar_select %p366, %s365, 1
          %s368 = smul.addr %s367, 8
          %s369 = scalar_lea.vmem %s1, %s368
          %s370 = smul.u32 2, %s30
        $region20: #{context_encoder_forward.1} parent=11 // pred_fallthru
          _
        // Predicated region
        $region21: #{context_encoder_forward.1} parent=11 // pred_check
          %p371 = pneg %p111
        $region22: #{context_encoder_forward.1} parent=11 // pred_check_branch
          %373 = sbr.rel (%p371) target = $region24
        $region23: #{context_encoder_forward.1} parent=11 // pred_region
          %s374 = smul.u32 2, %s30
          %p375 = scmp.lt.s32.totalorder %s374, 1
          %s376 = scalar_select %p375, %s374, 1
          %s377 = smul.addr %s376, 4
          %s378 = scalar_lea.vmem %s2, %s377
          %s379 = smul.u32 2, %s30
        $region24: #{context_encoder_forward.1} parent=11 // pred_fallthru
          _
        // Predicated region
        $region25: #{context_encoder_forward.1} parent=11 // pred_check
          %p380 = pneg %p132
        $region26: #{context_encoder_forward.1} parent=11 // pred_check_branch
          %382 = sbr.rel (%p380) target = $region28
        $region27: #{context_encoder_forward.1} parent=11 // pred_region
          _
        $region28: #{context_encoder_forward.1} parent=11 // pred_fallthru
          _
        // Predicated region
        $region29: #{context_encoder_forward.1} parent=11 // pred_check
          %p383 = pneg %p153
        $region30: #{context_encoder_forward.1} parent=11 // pred_check_branch
          %385 = sbr.rel (%p383) target = $region32
        $region31: #{context_encoder_forward.1} parent=11 // pred_region
          _
        $region32: #{context_encoder_forward.1} parent=11 // pred_fallthru
          _
        // Predicated region
        $region33: #{context_encoder_forward.1} parent=11 // pred_check
          %p386 = pneg %p174
        $region34: #{context_encoder_forward.1} parent=11 // pred_check_branch
          %388 = sbr.rel (%p386) target = $region36
        $region35: #{context_encoder_forward.1} parent=11 // pred_region
          _
        $region36: #{context_encoder_forward.1} parent=11 // pred_fallthru
          _
        // Predicated region
        $region37: #{context_encoder_forward.1} parent=11 // pred_check
          %p389 = pneg %p195
        $region38: #{context_encoder_forward.1} parent=11 // pred_check_branch
          %391 = sbr.rel (%p389) target = $region40
        $region39: #{context_encoder_forward.1} parent=11 // pred_region
          _
        $region40: #{context_encoder_forward.1} parent=11 // pred_fallthru
          _
        // Predicated region
        $region41: #{context_encoder_forward.1} parent=11 // pred_check
          %p392 = pneg %p216
        $region42: #{context_encoder_forward.1} parent=11 // pred_check_branch
          %394 = sbr.rel (%p392) target = $region44
        $region43: #{context_encoder_forward.1} parent=11 // pred_region
          _
        $region44: #{context_encoder_forward.1} parent=11 // pred_fallthru
          _
        // Predicated region
        $region45: #{context_encoder_forward.1} parent=11 // pred_check
          %p395 = pneg %p237
        $region46: #{context_encoder_forward.1} parent=11 // pred_check_branch
          %397 = sbr.rel (%p395) target = $region48
        $region47: #{context_encoder_forward.1} parent=11 // pred_region
          _
        $region48: #{context_encoder_forward.1} parent=11 // pred_fallthru
          _
        // Predicated region
        $region49: #{context_encoder_forward.1} parent=11 // pred_check
          %p398 = pneg %p258
        $region50: #{context_encoder_forward.1} parent=11 // pred_check_branch
          %400 = sbr.rel (%p398) target = $region52
        $region51: #{context_encoder_forward.1} parent=11 // pred_region
          _
        $region52: #{context_encoder_forward.1} parent=11 // pred_fallthru
          _
      $region12: #{context_encoder_forward.1} parent=5 // pred_fallthru
        _
      %p401 = scmp.lt.s32.totalorder %s21, 6
      // Predicated region
      $region53: #{context_encoder_forward.1} parent=5 // pred_check
        %p402 = pneg %p401
      $region54: #{context_encoder_forward.1} parent=5 // pred_check_branch
        %404 = sbr.rel (%p402) target = $region56
      $region55: #{context_encoder_forward.1} parent=5 // pred_region
        _
      $region56: #{context_encoder_forward.1} parent=5 // pred_fallthru
        _
      %p405 = scmp.le.s32.totalorder 1, %s21
      %p406 = scmp.lt.s32.totalorder %s21, 7
      %p407 = pnand %p405, %p406
      %p408 = pneg %p407
      // Predicated region
      $region57: #{context_encoder_forward.1} parent=5 // pred_check
        _
      $region58: #{context_encoder_forward.1} parent=5 // pred_check_branch
        %410 = sbr.rel (%p407) target = $region60
      $region59: #{context_encoder_forward.1} parent=5 // pred_region
        %s411 = ssub.s32 %s21, 1
        %s412 = smul.u32 2, %s30
        %p413 = scmp.lt.s32.totalorder %s412, 1
        %s414 = scalar_select %p413, %s412, 1
        %s415 = smul.addr %s414, 8
        %s416 = scalar_lea.vmem %s0, %s415
        %p417 = pneg %p59
        %p418 = pneg %p56
        %s419 = smul.u32 2, %s30
        %p420 = scmp.lt.s32.totalorder %s419, 1
        %s421 = scalar_select %p420, %s419, 1
        %s422 = smul.addr %s421, 8
        %s423 = scalar_lea.vmem %s1, %s422
        %p424 = pneg %p85
        %p425 = pneg %p82
        %s426 = smul.u32 2, %s30
        %p427 = scmp.lt.s32.totalorder %s426, 1
        %s428 = scalar_select %p427, %s426, 1
        %s429 = smul.addr %s428, 4
        %s430 = scalar_lea.vmem %s2, %s429
        %p431 = pneg %p111
        %p432 = pneg %p108
        %p433 = pneg %p132
        %p434 = pneg %p129
        %p435 = pneg %p153
        %p436 = pneg %p150
        %p437 = pneg %p174
        %p438 = pneg %p171
        %p439 = pneg %p195
        %p440 = pneg %p192
        %p441 = pneg %p216
        %p442 = pneg %p213
        %p443 = pneg %p237
        %p444 = pneg %p234
        %p445 = pneg %p258
        %p446 = pneg %p255
        %p447 = pneg %p286
        %p448 = pneg %p283
        %s449 = sand.u32 %s273, 1
        %s450 = sand.u32 %s273, 1
        %s451 = smul.addr %s450, 8
        %s452 = scalar_lea.vmem [#allocation4], %s451
        %p453 = pneg %p312
        %p454 = pneg %p309
        %s455 = smul.u32 2, %s30
        %p456 = scmp.lt.s32.totalorder %s455, 1
        %s457 = scalar_select %p456, %s455, 1
        %s458 = smul.addr %s457, 8
        %s459 = scalar_lea.vmem %s11, %s458
        %p460 = pneg %p338
        %p461 = pneg %p335
        %s462 = smul.u32 2, %s30
        %p463 = scmp.lt.s32.totalorder %s462, 1
        %s464 = scalar_select %p463, %s462, 1
        %s465 = smul.addr %s464, 8
        %s466 = scalar_lea.vmem %s12, %s465
        %s467 = smul.u32 2, %s30
        %p468 = scmp.lt.s32.totalorder %s467, 1
        %s469 = scalar_select %p468, %s467, 1
        %s470 = smul.addr %s469, 8
        %s471 = scalar_lea.vmem %s0, %s470
        %s472 = smul.u32 2, %s30
        %s473 = smul.u32 2, %s30
        %p474 = scmp.lt.s32.totalorder %s473, 1
        %s475 = scalar_select %p474, %s473, 1
        %s476 = smul.addr %s475, 8
        %s477 = scalar_lea.vmem %s1, %s476
        %s478 = smul.u32 2, %s30
        %s479 = smul.u32 2, %s30
        %p480 = scmp.lt.s32.totalorder %s479, 1
        %s481 = scalar_select %p480, %s479, 1
        %s482 = smul.addr %s481, 4
        %s483 = scalar_lea.vmem %s2, %s482
        %s484 = smul.u32 2, %s30
        %s485 = smul.u32 2, %s30
        %s486 = smul.u32 2, %s30
        %p487 = scmp.lt.s32.totalorder %s486, 1
        %s488 = scalar_select %p487, %s486, 1
        %s489 = smul.addr %s488, 8
        %s490 = scalar_lea.vmem %s11, %s489
        %s491 = smul.u32 2, %s30
        %s492 = smul.u32 2, %s30
        %p493 = scmp.lt.s32.totalorder %s492, 1
        %s494 = scalar_select %p493, %s492, 1
        %s495 = smul.addr %s494, 8
        %s496 = scalar_lea.vmem %s12, %s495
        %s497 = smul.u32 2, %s30
        %p498 = scmp.eq.s32.totalorder %s31, 0
        // Predicated region
        $region61: #{context_encoder_forward.1} parent=59 // pred_check
          %p499 = pneg %p498
        $region62: #{context_encoder_forward.1} parent=59 // pred_check_branch
          %501 = sbr.rel (%p499) target = $region64
        $region63: #{context_encoder_forward.1} parent=59 // pred_region
          %v502 = vld [vmem:[%s483] sm:$0x1]
          %v503 = vld [vmem:[%s483 + $0x4] sm:$0x1]
          %v506 = vrot.slane %v503, 7
          %vm507 = vcmask 1041409
          %v508 = vsel %vm507, %v506, %v502
          %vm510 = vcmask 254976
          %511 = vst.msk [vmem:[#allocation2] sm:$0x3] %vm510, %v508
          %v512 = vld [vmem:[%s483 + $0x1] sm:$0x1]
          %v513 = vld [vmem:[%s483 + $0x5] sm:$0x1]
          %v516 = vrot.slane %v513, 7
          %v517 = vsel %vm507, %v516, %v512
          %s519 = scalar_lea.vmem [#allocation2], 2
          %520 = vst.msk [vmem:[%s519] sm:$0x3] %vm510, %v517
          %v521 = vld [vmem:[%s483 + $0x2] sm:$0x1]
          %v522 = vld [vmem:[%s483 + $0x6] sm:$0x1]
          %v525 = vrot.slane %v522, 7
          %v526 = vsel %vm507, %v525, %v521
          %s528 = scalar_lea.vmem [#allocation2], 4
          %529 = vst.msk [vmem:[%s528] sm:$0x3] %vm510, %v526
        $region64: #{context_encoder_forward.1} parent=59 // pred_fallthru
          _
        %s530 = scalar_lea.vmem %s471, %s31
        %v531 = vld [vmem:[%s530] sm:$0x1]
        %v532 = vld [vmem:[%s530 + $0x8] sm:$0x1]
        %s533 = scalar_lea.vmem %s477, %s31
        %v534 = vld [vmem:[%s533] sm:$0x1]
        %v535 = vld [vmem:[%s533 + $0x8] sm:$0x1]
        %v536 = vld [vmem:[#allocation2] sm:$0x3]
        %s537 = scalar_lea.vmem [#allocation2], 2
        %v538 = vld [vmem:[%s537] sm:$0x3]
        %s539 = scalar_lea.vmem [#allocation2], 4
        %v540 = vld [vmem:[%s539] sm:$0x3]
        %v542 = vrot.slane %v538, 6
        %v545 = vrot.slane %v540, 4
        %vm547 = vcmask 1041408
        %v548 = vsel %vm547, %v536, %v542
        %vm549 = vcmask 1043456
        %v550 = vsel %vm549, %v548, %v545
        %v553 = vrot.slane %v532, 7
        %vm554 = vcmask 1041409
        %v555 = vsel %vm554, %v553, %v531
        %v557 = vrot.slane %v531, 6
        %v558 = vrot.slane %v532, 5
        %vm559 = vcmask 1043459
        %v560 = vsel %vm559, %v558, %v557
        %v562 = vrot.slane %v531, 4
        %v563 = vrot.slane %v532, 3
        %vm564 = vcmask 1045509
        %v565 = vsel %vm564, %v563, %v562
        %v567 = vsel %vm547, %v555, %v560
        %v568 = vsel %vm549, %v567, %v565
        %v569 = vld [vmem:[%s3] sm:$0xff]
        %v570 = vld [vmem:[%s3 + $0x8] sm:$0xff]
        %v571 = vld [vmem:[%s3 + $0x10] sm:$0xff]
        %v572 = vld [vmem:[%s3 + $0x18] sm:$0xff]
        %vm573 = vcmask 261120
        %v575 = vsel %vm573, %v550, 0
        %577 = vmatpush.msra.mxu0 0.0
        %578 = vmatpush.msra.mxu0 0.0
        %579 = vmatpush.msra.mxu0 0.0
        %580 = vmatpush.msra.mxu0 0.0
        %581 = vmatpush.msra.mxu0 0.0
        %582 = vmatpush.msra.mxu0 0.0
        %583 = vmatpush.msra.mxu0 0.0
        %584 = vmatpush.msra.mxu0 0.0
        %585 = vmatpush.msra.mxu0 0.0
        %586 = vmatpush.msra.mxu0 0.0
        %587 = vmatpush.msra.mxu0 0.0
        %588 = vmatpush.msra.mxu0 0.0
        %589 = vmatpush.msra.mxu0 %v572
        %590 = vmatpush.msra.mxu0 %v571
        %591 = vmatpush.msra.mxu0 %v570
        %592 = vmatpush.msra.mxu0 %v569
        %593 = vmatmul.f32.gmra.mxu0 %v575
        %v594 = vpop.f32.mrf.mxu0
        %v595 = vadd.f32 %v568, %v594
        %596 = vdwg.mxu0
        %v597 = vmax.f32 %v595, 0.0
        %v598 = vld [vmem:[%s4] sm:$0xff]
        %v599 = vld [vmem:[%s4 + $0x8] sm:$0xff]
        %v600 = vld [vmem:[%s4 + $0x10] sm:$0xff]
        %v601 = vld [vmem:[%s4 + $0x18] sm:$0xff]
        %v602 = vld [vmem:[%s5] sm:$0x1]
        %v604 = vperm.slane %v602, 0
        %v607 = vsel %vm573, %v597, 0
        %609 = vmatpush.msra.mxu0 0.0
        %610 = vmatpush.msra.mxu0 0.0
        %611 = vmatpush.msra.mxu0 0.0
        %612 = vmatpush.msra.mxu0 0.0
        %613 = vmatpush.msra.mxu0 0.0
        %614 = vmatpush.msra.mxu0 0.0
        %615 = vmatpush.msra.mxu0 0.0
        %616 = vmatpush.msra.mxu0 0.0
        %617 = vmatpush.msra.mxu0 0.0
        %618 = vmatpush.msra.mxu0 0.0
        %619 = vmatpush.msra.mxu0 0.0
        %620 = vmatpush.msra.mxu0 0.0
        %621 = vmatpush.msra.mxu0 %v601
        %622 = vmatpush.msra.mxu0 %v600
        %623 = vmatpush.msra.mxu0 %v599
        %624 = vmatpush.msra.mxu0 %v598
        %625 = vmatmul.f32.gmra.mxu0 %v607
        %v626 = vpop.f32.mrf.mxu0
        %v627 = vadd.f32 %v604, %v626
        %628 = vdwg.mxu0
        %v629 = vmax.f32 %v627, 0.0
        %v630 = vld [vmem:[%s6] sm:$0x1]
        %v632 = vperm.slane %v630, 0
        %v634 = vmul.f32 %v629, %v632
        %vm635 = vcmask 259072
        %v636 = vsel %vm635, %v634, 0.0
        %637 = vadd.xlane.f32.xlu0 %v636
        %v638 = vpop.xlane.xlu0 %637
        %v639 = vld [vmem:[#allocation3] sm:$0x1]
        %v641 = vperm.slane %v639, 0
        %v643 = vadd.f32 %v638, %v641
        %v644 = vmax.f32 %v643, 0.0
        %v646 = vrot.slane %v644, 2
        %647 = vrot.lane.b32.xlu0 %v646, 1
        %v648 = vpop.permute.xlu0 %647
        %v650 = vrot.slane %v644, 4
        %651 = vrot.lane.b32.xlu0 %v650, 2
        %v652 = vpop.permute.xlu0 %651
        %vm654 = vcmask 7168
        %v655 = vsel %vm654, %v644, %v648
        %vm656 = vcmask 15360
        %v657 = vsel %vm656, %v655, %v652
        %v658 = vlaneseq
        %v659 = vand.u32 %v658, 127
        %vm660 = vcmask 17408
        %v661 = vsel %vm660, %v657, -inf
        %662 = vmax.xlane.f32.xlu0 %v661
        %v663 = vpop.xlane.xlu0 %662
        %vm664 = vcmp.ge.f32.partialorder %v657, %v663
        %v665 = vsel %vm664, %v659, 3
        %v666 = vsel %vm660, %v665, 2147483647
        %v667 = vand.u32 %v666, 65535
        %v668 = vshra.s32 %v666, 16
        %v669 = vcvt.s32.f32 %v667
        %v670 = vcvt.s32.f32 %v668
        %671 = vmin.xlane.f32.xlu0 %v670
        %v672 = vpop.xlane.xlu0 %671
        %vm673 = vcmp.eq.f32.partialorder %v670, %v672
        %v674 = vsel %vm673, %v669, inf
        %675 = vmin.xlane.f32.xlu0 %v674
        %v676 = vpop.xlane.xlu0 %675
        %v677 = vcvt.f32.s32 %v676
        %v678 = vcvt.f32.s32 %v672
        %v679 = vshll.u32 %v678, 16
        %v680 = vadd.s32 %v679, %v677
        %p681 = scmp.lt.s32.totalorder %s31, 3
        %v682 = vstv %s31
        %s683 = scalar_select %p681, 1, 0
        %v684 = vstv %s683
        %vm685 = vcmp.eq.s32.totalorder %v684, 1
        %v686 = vsel %vm685, %v682, %v680
        %v687 = vsel %vm685, 1.0, %v657
        %vm688 = vcmp.eq.s32.totalorder %v659, %v686
        %v689 = vsel %vm688, 1, 0
        %v690 = vcvt.s32.f32 %v689
        %692 = vset.pattern.permute.xlu0 0
        %693 = vperm.xlu0 %692, %v690
        %v694 = vpop.permute.xlu0 %693
        %v696 = vmul.f32 %v694, %v536
        %v697 = vadd.f32 %v696, 0.0
        %698 = vset.pattern.permute.xlu0 1
        %699 = vperm.xlu0 %698, %v690
        %v700 = vpop.permute.xlu0 %699
        %v702 = vmul.f32 %v700, %v538
        %v703 = vadd.f32 %v697, %v702
        %704 = vset.pattern.permute.xlu0 2
        %705 = vperm.xlu0 %704, %v690
        %v706 = vpop.permute.xlu0 %705
        %v708 = vmul.f32 %v706, %v540
        %v709 = vadd.f32 %v703, %v708
        %v710 = vld [vmem:[%s8] sm:$0xff]
        %v711 = vld [vmem:[%s8 + $0x8] sm:$0xff]
        %v712 = vld [vmem:[%s8 + $0x10] sm:$0xff]
        %v713 = vld [vmem:[%s8 + $0x18] sm:$0xff]
        %v714 = vld [vmem:[%s9] sm:$0x1]
        %v716 = vperm.slane %v714, 0
        %v719 = vsel %vm573, %v709, 0
        %721 = vmatpush.msra.mxu0 0.0
        %722 = vmatpush.msra.mxu0 0.0
        %723 = vmatpush.msra.mxu0 0.0
        %724 = vmatpush.msra.mxu0 0.0
        %725 = vmatpush.msra.mxu0 0.0
        %726 = vmatpush.msra.mxu0 0.0
        %727 = vmatpush.msra.mxu0 0.0
        %728 = vmatpush.msra.mxu0 0.0
        %729 = vmatpush.msra.mxu0 0.0
        %730 = vmatpush.msra.mxu0 0.0
        %731 = vmatpush.msra.mxu0 0.0
        %732 = vmatpush.msra.mxu0 0.0
        %733 = vmatpush.msra.mxu0 %v713
        %734 = vmatpush.msra.mxu0 %v712
        %735 = vmatpush.msra.mxu0 %v711
        %736 = vmatpush.msra.mxu0 %v710
        %737 = vmatmul.f32.gmra.mxu0 %v719
        %v738 = vpop.f32.mrf.mxu0
        %v739 = vadd.f32 %v716, %v738
        %740 = vdwg.mxu0
        %v742 = vrot.slane %v739, 1
        %v745 = vadd.f32 %v534, %v739
        %v746 = vadd.f32 %v535, %v742
        %v747 = vxor.u32 %v745, 2147483648
        %v748 = vxor.u32 %v746, 2147483648
        %v749 = vmul.f32 %v747, 1.442695
        %v750 = vpow.pop %v749
        %v751 = vmul.f32 %v748, 1.442695
        %v752 = vpow.pop %v751
        %v753 = vadd.f32 %v750, 1.0
        %v754 = vadd.f32 %v752, 1.0
        %v755 = vrcp.pop %v753
        %v756 = vmul.f32 %v753, %v755
        %v757 = vsub.f32 1.0, %v756
        %v758 = vmul.f32 %v755, %v757
        %v759 = vadd.f32 %v755, %v758
        %vm760 = vweird.f32 %v753
        %vm761 = vweird.f32 %v755
        %vm762 = vmor %vm760, %vm761
        %v763 = vsel %vm762, %v755, %v759
        %v764 = vand.u32 2147483647, %v753
        %vm765 = vcmp.eq.f32.partialorder %v764, 8.507059e+37
        %v766 = vand.u32 %v753, 2147483648
        %v767 = vor.u32 1.1754944e-38, %v766
        %v768 = vsel %vm765, %v767, %v763
        %v769 = vmul.f32 1.0, %v768
        %v770 = vrcp.pop %v754
        %v771 = vmul.f32 %v754, %v770
        %v772 = vsub.f32 1.0, %v771
        %v773 = vmul.f32 %v770, %v772
        %v774 = vadd.f32 %v770, %v773
        %vm775 = vweird.f32 %v754
        %vm776 = vweird.f32 %v770
        %vm777 = vmor %vm775, %vm776
        %v778 = vsel %vm777, %v770, %v774
        %v779 = vand.u32 2147483647, %v754
        %vm780 = vcmp.eq.f32.partialorder %v779, 8.507059e+37
        %v781 = vand.u32 %v754, 2147483648
        %v782 = vor.u32 1.1754944e-38, %v781
        %v783 = vsel %vm780, %v782, %v778
        %v784 = vmul.f32 1.0, %v783
        %785 = vrot.lane.b32.xlu0 %v739, 64
        %v786 = vpop.permute.xlu0 %785
        %787 = vrot.lane.b32.xlu0 %v742, 64
        %v788 = vpop.permute.xlu0 %787
        %v791 = vmul.f32 %v769, %v786
        %v792 = vmul.f32 %v784, %v788
        %795 = vrot.lane.b32.xlu0 %v791, 64
        %v796 = vpop.permute.xlu0 %795
        %797 = vrot.lane.b32.xlu0 %v792, 64
        %v798 = vpop.permute.xlu0 %797
        %v801 = vadd.f32 %v534, %v796
        %v802 = vadd.f32 %v535, %v798
        %v803 = vtanh.pop %v801
        %v804 = vtanh.pop %v802
        %v805 = vsub.f32 1.0, %v769
        %v806 = vsub.f32 1.0, %v784
        %809 = vrot.lane.b32.xlu0 %v803, 96
        %v810 = vpop.permute.xlu0 %809
        %811 = vrot.lane.b32.xlu0 %v804, 96
        %v812 = vpop.permute.xlu0 %811
        %v815 = vmul.f32 %v805, %v810
        %v816 = vmul.f32 %v806, %v812
        %v817 = vrot.slane %v709, 1
        %818 = vrot.lane.b32.xlu0 %v709, 32
        %v819 = vpop.permute.xlu0 %818
        %820 = vrot.lane.b32.xlu0 %v817, 32
        %v821 = vpop.permute.xlu0 %820
        %v824 = vmul.f32 %v769, %v819
        %v825 = vmul.f32 %v784, %v821
        %v826 = vadd.f32 %v815, %v824
        %v827 = vadd.f32 %v816, %v825
        %v828 = vsub.f32 1.0, %v690
        %830 = vset.pattern.permute.xlu0 0
        %831 = vperm.xlu0 %830, %v828
        %v832 = vpop.permute.xlu0 %831
        %v834 = vmul.f32 %v536, %v832
        %v835 = vrot.slane %v694, 1
        %v837 = vmul.f32 %v826, %v694
        %v838 = vmul.f32 %v827, %v835
        %v841 = vrot.slane %v838, 7
        %v842 = vsel %vm554, %v841, %v837
        %843 = vrot.lane.b32.xlu0 %v842, 96
        %v844 = vpop.permute.xlu0 %843
        %v846 = vadd.f32 %v834, %v844
        %vm847 = vcmask 254976
        %848 = vst.msk [vmem:[#allocation2] sm:$0x3] %vm847, %v846
        %v850 = vrot.slane %v846, 1
        %vm852 = vcmask 253952
        %853 = vst.msk [vmem:[%s452] sm:$0x1] %vm852, %v846
        %854 = vst.msk [vmem:[%s452 + $0x4] sm:$0x1] %vm852, %v850
        %855 = vset.pattern.permute.xlu0 1
        %856 = vperm.xlu0 %855, %v828
        %v857 = vpop.permute.xlu0 %856
        %v859 = vmul.f32 %v538, %v857
        %v860 = vrot.slane %v700, 1
        %v862 = vmul.f32 %v826, %v700
        %v863 = vmul.f32 %v827, %v860
        %v866 = vrot.slane %v863, 7
        %v867 = vsel %vm554, %v866, %v862
        %868 = vrot.lane.b32.xlu0 %v867, 96
        %v869 = vpop.permute.xlu0 %868
        %v871 = vadd.f32 %v859, %v869
        %872 = vst.msk [vmem:[%s537] sm:$0x3] %vm847, %v871
        %v874 = vrot.slane %v871, 1
        %876 = vst.msk [vmem:[%s452 + $0x1] sm:$0x1] %vm852, %v871
        %877 = vst.msk [vmem:[%s452 + $0x5] sm:$0x1] %vm852, %v874
        %878 = vset.pattern.permute.xlu0 2
        %879 = vperm.xlu0 %878, %v828
        %v880 = vpop.permute.xlu0 %879
        %v882 = vmul.f32 %v540, %v880
        %v883 = vrot.slane %v706, 1
        %v885 = vmul.f32 %v826, %v706
        %v886 = vmul.f32 %v827, %v883
        %v889 = vrot.slane %v886, 7
        %v890 = vsel %vm554, %v889, %v885
        %891 = vrot.lane.b32.xlu0 %v890, 96
        %v892 = vpop.permute.xlu0 %891
        %v894 = vadd.f32 %v882, %v892
        %895 = vst.msk [vmem:[%s539] sm:$0x3] %vm847, %v894
        %v897 = vrot.slane %v894, 1
        %899 = vst.msk [vmem:[%s452 + $0x2] sm:$0x1] %vm852, %v894
        %900 = vst.msk [vmem:[%s452 + $0x6] sm:$0x1] %vm852, %v897
        %v902 = vrot.slane %v687, 1
        %s904 = scalar_lea.vmem %s490, %s31
        %vm905 = vcmask 16384
        %906 = vst.msk [vmem:[%s904] sm:$0x1] %vm905, %v687
        %907 = vst.msk [vmem:[%s904 + $0x8] sm:$0x1] %vm905, %v902
        %v908 = vperm.slane %v686, 0
        %v909 = vperm.slane %v686, 1
        %s910 = scalar_lea.vmem %s496, %s31
        %vm911 = vcmask 0
        %912 = vst.msk [vmem:[%s910] sm:$0x1] %vm911, %v908
        %913 = vst.msk [vmem:[%s910 + $0x8] sm:$0x1] %vm911, %v909
        %s914 = sand.u32 %s273, 1
        %s915 = sand.u32 %s273, 1
        %s916 = smul.addr %s915, 8
        %s917 = scalar_lea.vmem [#allocation4], %s916
        %s918 = smul.u32 2, %s30
        %p919 = scmp.lt.s32.totalorder %s918, 1
        %s920 = scalar_select %p919, %s918, 1
        %s921 = smul.addr %s920, 8
        %s922 = scalar_lea.vmem %s11, %s921
        %s923 = smul.u32 2, %s30
        %p924 = scmp.lt.s32.totalorder %s923, 1
        %s925 = scalar_select %p924, %s923, 1
        %s926 = smul.addr %s925, 8
        %s927 = scalar_lea.vmem %s12, %s926
        // Predicated region
        $region65: #{context_encoder_forward.1} parent=59 // pred_check
          %p928 = pneg %p283
        $region66: #{context_encoder_forward.1} parent=59 // pred_check_branch
          %930 = sbr.rel (%p928) target = $region68
        $region67: #{context_encoder_forward.1} parent=59 // pred_region
          %s931 = smul.u32 2, %s30
          %s932 = smul.addr %s931, 6
          %s933 = sadd.s32 %s31, %s932
          %s934 = smul.addr %s933, 4
          %s935 = scalar_lea.vmem %s10, %s934
          // Predicated region
          $region69: #{context_encoder_forward.1} parent=67 // pred_check
            _
          $region70: #{context_encoder_forward.1} parent=67 // pred_check_branch
            %937 = sbr.rel (0) target = $region72
          $region71: #{context_encoder_forward.1} parent=67 // pred_region
            // Predicated region
            $region73: #{context_encoder_forward.1} parent=71 // pred_check
              _
            $region74: #{context_encoder_forward.1} parent=71 // pred_check_branch
              %939 = sbr.rel target = $region76
            $region75: #{context_encoder_forward.1} parent=71 // pred_region
              // Predicated region
              $region88: #{context_encoder_forward.1} parent=75 // pred_check
                _
              $region89: #{context_encoder_forward.1} parent=75 // pred_check_branch
                %957 = sbr.rel (0) target = $region91
              $region90: #{context_encoder_forward.1} parent=75 // pred_region
                loop: start=0, step=1, limit=1
                $region92: #{context_encoder_forward.1} parent=90 // loop_pre_header
                  _
                $region93: #{context_encoder_forward.1} parent=90 // loop_header
                  %s959 = sphi 0, %s963
                  %p960 = scmp.ge.s32.totalorder %s959, 1
                  %s964 = sphi %s917, %s917
                  %s965 = sphi %s935, %s935
                $region94: #{context_encoder_forward.1} parent=90 // loop_header_branch
                  %962 = sbr.rel (%p960) target = $region98
                $region95: #{context_encoder_forward.1} parent=90 // loop_body
                  _
                $region96: #{context_encoder_forward.1} parent=90 // loop_footer
                  %s963 = sadd.s32 1, %s959
                $region97: #{context_encoder_forward.1} parent=90 // loop_footer_branch
                  %958 = sbr.rel target = $region93
                $region98: #{context_encoder_forward.1} parent=90 // loop_exit
                  _
                %s967 = ssub.s32 16, 1
                loop: start=0, step=1, limit=1
                $region99: #{context_encoder_forward.1} parent=90 // loop_pre_header
                  _
                $region100: #{context_encoder_forward.1} parent=90 // loop_header
                  %s969 = sphi 0, %s973
                  %p970 = scmp.ge.s32.totalorder %s969, 1
                  %s974 = sphi %s917, %s917
                  %s975 = sphi %s935, %s935
                $region101: #{context_encoder_forward.1} parent=90 // loop_header_branch
                  %972 = sbr.rel (%p970) target = $region105
                $region102: #{context_encoder_forward.1} parent=90 // loop_body
                  %v976 = vld [vmem:[%s974] sm:%s967]
                  %977 = vst [vmem:[%s975] sm:%s967] %v976
                  %v978 = vld [vmem:[%s974 + $0x4] sm:%s967]
                  %979 = vst [vmem:[%s975 + $0x18] sm:%s967] %v978
                $region103: #{context_encoder_forward.1} parent=90 // loop_footer
                  %s973 = sadd.s32 1, %s969
                $region104: #{context_encoder_forward.1} parent=90 // loop_footer_branch
                  %968 = sbr.rel target = $region100
                $region105: #{context_encoder_forward.1} parent=90 // loop_exit
                  _
              $region91: #{context_encoder_forward.1} parent=75 // pred_fallthru
                _
            $region76: #{context_encoder_forward.1} parent=71 // pred_fallthru
              _
            // Predicated region
            $region77: #{context_encoder_forward.1} parent=71 // pred_check
              _
            $region78: #{context_encoder_forward.1} parent=71 // pred_check_branch
              %941 = sbr.rel (0) target = $region80
            $region79: #{context_encoder_forward.1} parent=71 // pred_region
              %s943 = ssub.s32 16, 1
              loop: start=0, step=1, limit=1
              $region81: #{context_encoder_forward.1} parent=79 // loop_pre_header
                _
              $region82: #{context_encoder_forward.1} parent=79 // loop_header
                %s945 = sphi 0, %s949
                %p946 = scmp.ge.s32.totalorder %s945, 1
                %s950 = sphi %s917, %s917
                %s951 = sphi %s935, %s935
              $region83: #{context_encoder_forward.1} parent=79 // loop_header_branch
                %948 = sbr.rel (%p946) target = $region87
              $region84: #{context_encoder_forward.1} parent=79 // loop_body
                %v952 = vld [vmem:[%s950] sm:%s943]
                %953 = vst [vmem:[%s951] sm:%s943] %v952
                %v954 = vld [vmem:[%s950 + $0x4] sm:%s943]
                %955 = vst [vmem:[%s951 + $0x18] sm:%s943] %v954
              $region85: #{context_encoder_forward.1} parent=79 // loop_footer
                %s949 = sadd.s32 1, %s945
              $region86: #{context_encoder_forward.1} parent=79 // loop_footer_branch
                %944 = sbr.rel target = $region82
              $region87: #{context_encoder_forward.1} parent=79 // loop_exit
                _
            $region80: #{context_encoder_forward.1} parent=71 // pred_fallthru
              _
          $region72: #{context_encoder_forward.1} parent=67 // pred_fallthru
            _
          %980 = vnop
        $region68: #{context_encoder_forward.1} parent=59 // pred_fallthru
          _
        // Predicated region
        $region106: #{context_encoder_forward.1} parent=59 // pred_check
          %p981 = pneg %p309
        $region107: #{context_encoder_forward.1} parent=59 // pred_check_branch
          %983 = sbr.rel (%p981) target = $region109
        $region108: #{context_encoder_forward.1} parent=59 // pred_region
          %s984 = smul.u32 2, %s30
        $region109: #{context_encoder_forward.1} parent=59 // pred_fallthru
          _
        // Predicated region
        $region110: #{context_encoder_forward.1} parent=59 // pred_check
          %p985 = pneg %p335
        $region111: #{context_encoder_forward.1} parent=59 // pred_check_branch
          %987 = sbr.rel (%p985) target = $region113
        $region112: #{context_encoder_forward.1} parent=59 // pred_region
          %s988 = smul.u32 2, %s30
        $region113: #{context_encoder_forward.1} parent=59 // pred_fallthru
          _
        // Predicated region
        $region114: #{context_encoder_forward.1} parent=59 // pred_check
          %p989 = pneg %p309
        $region115: #{context_encoder_forward.1} parent=59 // pred_check_branch
          %991 = sbr.rel (%p989) target = $region117
        $region116: #{context_encoder_forward.1} parent=59 // pred_region
          %s992 = smul.u32 2, %s30
          %p993 = scmp.lt.s32.totalorder %s992, 1
          %s994 = scalar_select %p993, %s992, 1
          %s995 = smul.addr %s994, 8
          %s996 = scalar_lea.vmem %s11, %s995
        $region117: #{context_encoder_forward.1} parent=59 // pred_fallthru
          _
        // Predicated region
        $region118: #{context_encoder_forward.1} parent=59 // pred_check
          %p997 = pneg %p335
        $region119: #{context_encoder_forward.1} parent=59 // pred_check_branch
          %999 = sbr.rel (%p997) target = $region121
        $region120: #{context_encoder_forward.1} parent=59 // pred_region
          %s1000 = smul.u32 2, %s30
          %p1001 = scmp.lt.s32.totalorder %s1000, 1
          %s1002 = scalar_select %p1001, %s1000, 1
          %s1003 = smul.addr %s1002, 8
          %s1004 = scalar_lea.vmem %s12, %s1003
        $region121: #{context_encoder_forward.1} parent=59 // pred_fallthru
          _
      $region60: #{context_encoder_forward.1} parent=5 // pred_fallthru
        _
      %p1005 = scmp.le.s32.totalorder 2, %s21
      // Predicated region
      $region122: #{context_encoder_forward.1} parent=5 // pred_check
        %p1006 = pneg %p1005
      $region123: #{context_encoder_forward.1} parent=5 // pred_check_branch
        %1008 = sbr.rel (%p1006) target = $region125
      $region124: #{context_encoder_forward.1} parent=5 // pred_region
        %s1009 = ssub.s32 %s21, 2
        // Predicated region
        $region126: #{context_encoder_forward.1} parent=124 // pred_check
          %p1010 = pneg %p289
        $region127: #{context_encoder_forward.1} parent=124 // pred_check_branch
          %1012 = sbr.rel (%p1010) target = $region129
        $region128: #{context_encoder_forward.1} parent=124 // pred_region
          %s1013 = sand.u32 %s274, 1
          %s1014 = sand.u32 %s274, 1
          %s1015 = smul.addr %s1014, 8
          %s1016 = scalar_lea.vmem [#allocation4], %s1015
        $region129: #{context_encoder_forward.1} parent=124 // pred_fallthru
          _
      $region125: #{context_encoder_forward.1} parent=5 // pred_fallthru
        _
    $region6: #{context_encoder_forward.1} parent=1 // loop_footer
      %s25 = sadd.s32 1, %s21
    $region7: #{context_encoder_forward.1} parent=1 // loop_footer_branch
      %20 = sbr.rel target = $region3
    $region8: #{context_encoder_forward.1} parent=1 // loop_exit
      _

</llo_original>
